<compile_context>
chip_gen: v6e
topology: v6e:2x2x1
jax: 0.10.0
libtpu: 0.0.40
codegen_flags: <defaults>
</compile_context>

<pallas_src>
import numpy as np
import jax
import jax.numpy as jnp
from jax import lax
from jax.experimental import pallas as pl
from jax.experimental.pallas import tpu as pltpu


def weighted_agg_kernel(nbr_ref, feat_hbm, w_ref, cnt_ref, out_ref, gbuf, sems):
    """One grid step aggregates TM output nodes.

    nbr_ref : [n_pad*K] int32 SMEM (scalar prefetch), node-major flattened table
    feat_hbm: [N, D]    f32 raw HBM ref (memory_space=ANY) -> manual DMA gather
    w_ref   : [TM, K]   f32 VMEM block (out-of-count slots already zeroed)
    cnt_ref : [TM, 1]   int32 VMEM block (true neighbor counts)
    out_ref : [TM, D]   f32 VMEM block (lane-dense)
    gbuf    : [K*TM, D] f32 VMEM gather scratch (group k = rows k*TM .. (k+1)*TM)
    sems    : [K]       DMA semaphores, one per neighbor-slot group
    """
    TM, D = out_ref.shape
    K = w_ref.shape[1]
    base = pl.program_id(0) * TM                      # first node of this tile

    # ---- gather machinery -------------------------------------------------------
    def issue_group(k):                               # k is a static Python int
        @pl.loop(0, TM)
        def _(m):
            idx = nbr_ref[(base + m) * K + k]         # scalar read from SMEM
            pltpu.make_async_copy(feat_hbm.at[idx],
                                  gbuf.at[k * TM + m],
                                  sems.at[k]).start()

    def wait_group(k):
        # All TM row copies of group k signal sems[k]; DMA semaphores accumulate
        # bytes, so one wait sized for the whole [TM, D] group region covers them.
        grp = gbuf.at[pl.ds(k * TM, TM), :]
        pltpu.make_async_copy(grp, grp, sems.at[k]).wait()

    LOOKAHEAD = min(2, K)                             # groups kept in flight
    for k in range(LOOKAHEAD):                        # prime the pipeline
        issue_group(k)

    # ---- per-slot effective weights (VPU work overlapping the in-flight gather) --
    w = w_ref[...]                                    # [TM, K] (pre-masked)
    cnt_i = cnt_ref[...]                              # [TM, 1] int32
    cnt = cnt_i.astype(jnp.float32)
    valid = (lax.broadcasted_iota(jnp.int32, (TM, K), 1) < cnt_i).astype(jnp.float32)
    wsum = jnp.sum(w, axis=1, keepdims=True)          # [TM, 1]
    use_w = wsum != 0.0
    # Exact division (matches the PyTorch module; no approx reciprocal).
    eff = jnp.where(use_w,
                    w / jnp.where(use_w, wsum, 1.0),      # weighted path
                    valid / jnp.maximum(cnt, 1.0))        # mean path (0 if cnt==0)

    # ---- pipelined wait + accumulate over neighbor-slot groups -------------------
    acc = jnp.zeros((TM, D), jnp.float32)             # 16 vregs at TM=D=128
    for k in range(K):                                # K is small -> static unroll
        if k + LOOKAHEAD < K:
            issue_group(k + LOOKAHEAD)                # keep the DMA engine busy
        wait_group(k)
        acc = acc + eff[:, k:k + 1] * gbuf[k * TM:(k + 1) * TM, :]
    out_ref[...] = acc.astype(out_ref.dtype)


def weighted_aggregate(features, neighbors, weights, counts, *, tile_m=128):
    """features [N, D] f32, neighbors [N, K] int32 (padded), weights [N, K] f32,
    counts [N] int32 -> aggregated [N, D] f32 (== WeightedAggregator.forward)."""
    N, D = features.shape
    K = neighbors.shape[1]
    counts = counts.astype(jnp.int32)

    # Densify / sanitize (mirrors turning the list-of-lists into padded tensors):
    #  * out-of-count weight slots -> 0 (so the in-kernel sum over K is the true sum)
    #  * ALL neighbor indices clamped to [0, N) so every gather DMA is in-bounds.
    slot = jnp.arange(K, dtype=jnp.int32)[None, :]
    in_count = slot < counts[:, None]                                  # [N, K] bool
    nbr = jnp.clip(jnp.where(in_count, neighbors.astype(jnp.int32), 0), 0, N - 1)
    w = jnp.where(in_count, weights.astype(jnp.float32), 0.0)
    cnt = counts[:, None]                                              # [N, 1] int32

    # Pad the node axis so it tiles evenly (padded rows: cnt=0 -> zeros, sliced off).
    n_pad = pl.cdiv(N, tile_m) * tile_m
    if n_pad != N:
        pad = ((0, n_pad - N), (0, 0))
        nbr, w, cnt = jnp.pad(nbr, pad), jnp.pad(w, pad), jnp.pad(cnt, pad)

    # Flattened 1-D neighbor table -> SMEM scalar prefetch (no 2-D SMEM lane padding).
    nbr_flat = nbr.reshape(-1)

    grid_spec = pltpu.PrefetchScalarGridSpec(
        num_scalar_prefetch=1,                          # neighbor table -> SMEM
        grid=(n_pad // tile_m,),
        in_specs=[
            pl.BlockSpec(memory_space=pl.ANY),                      # features stay in HBM
            pl.BlockSpec((tile_m, K), lambda i, nbr: (i, 0)),       # weights
            pl.BlockSpec((tile_m, 1), lambda i, nbr: (i, 0)),       # counts
        ],
        out_specs=pl.BlockSpec((tile_m, D), lambda i, nbr: (i, 0)),
        scratch_shapes=[
            pltpu.VMEM((K * tile_m, D), jnp.float32),   # gather buffer (per-group regions)
            pltpu.SemaphoreType.DMA((K,)),              # one semaphore per slot group
        ],
    )

    out = pl.pallas_call(
        weighted_agg_kernel,
        out_shape=jax.ShapeDtypeStruct((n_pad, D), jnp.float32),
        grid_spec=grid_spec,
        compiler_params=pltpu.CompilerParams(
            dimension_semantics=("parallel",)),         # node tiles are independent
    )(nbr_flat, features.astype(jnp.float32), w, cnt)
    return out[:N]


def reference_numpy(features, neighbors, weights, counts):
    """Pure numpy mirror of the PyTorch forward pass."""
    f = np.asarray(features, np.float32)
    nb = np.asarray(neighbors)
    w = np.asarray(weights, np.float32)
    c = np.asarray(counts)
    N, D = f.shape
    out = np.zeros((N, D), np.float32)
    for i in range(N):
        n = int(c[i])
        if n == 0:
            continue
        nf = f[nb[i, :n]]
        ww = w[i, :n]
        s = np.float32(ww.sum())
        if s == 0:
            out[i] = nf.mean(axis=0)
        else:
            out[i] = (nf * (ww / s)[:, None]).sum(axis=0)
    return out


if __name__ == "__main__":
    N, K, D = 256, 8, 128
    TILE_M = 128                                     # grid of 2 -> splittable on v7x
    key = jax.random.PRNGKey(0)
    kf, kn, kw, kc = jax.random.split(key, 4)

    features = jax.random.normal(kf, (N, D), dtype=jnp.float32)
    neighbors = jax.random.randint(kn, (N, K), 0, N, dtype=jnp.int32)
    weights = jax.random.uniform(kw, (N, K), dtype=jnp.float32)
    counts = jax.random.randint(kc, (N,), 0, K + 1, dtype=jnp.int32)

    # Deterministic edge cases:
    counts = counts.at[0].set(0)                     # no neighbors           -> zeros
    counts = counts.at[7].set(0)                     # another empty node
    counts = counts.at[1].set(3)                     # weight sum exactly 0   -> mean path
    weights = weights.at[1, :3].set(jnp.array([1.0, -2.0, 1.0], jnp.float32))
    counts = counts.at[N - 1].set(K)                 # full fan-in in the last tile

    out = weighted_aggregate(features, neighbors, weights, counts, tile_m=TILE_M)
    out = jax.block_until_ready(out)

    ref = reference_numpy(features, neighbors, weights, counts)
    np.testing.assert_allclose(np.asarray(out), ref, rtol=1e-5, atol=1e-5)
    print("KERNEL_OK")
</pallas_src>

<mosaic_0001>
module attributes {stable_mosaic.version = 11 : i64} {
  func.func @weighted_agg_kernel(%arg0: i32, %arg1: memref<2048xi32, #tpu.memory_space<smem>>, %arg2: memref<256x128xf32, #tpu.memory_space<any>>, %arg3: memref<128x8xf32, #tpu.memory_space<vmem>>, %arg4: memref<128x1xi32, #tpu.memory_space<vmem>>, %arg5: memref<128x128xf32, #tpu.memory_space<vmem>>, %arg6: memref<1024x128xf32, #tpu.memory_space<vmem>>, %arg7: memref<8x!tpu.dma_semaphore, #tpu.memory_space<semaphore_mem>>) attributes {dimension_semantics = [#tpu.dimension_semantics<parallel>], iteration_bounds = array<i64: 2>, scalar_prefetch = 1 : i64, scratch_operands = 2 : i64, tpu.core_type = #tpu.core_type<tc>, window_params = [{}, {transform_indices = @transform_1, window_bounds = array<i64: 128, 8>}, {transform_indices = @transform_2, window_bounds = array<i64: 128, 1>}, {transform_indices = @transform_3, window_bounds = array<i64: 128, 128>}]} {
    %c128_i32 = arith.constant 128 : i32
    %0 = arith.muli %arg0, %c128_i32 : i32
    %c0_i32 = arith.constant 0 : i32
    %c128_i32_0 = arith.constant 128 : i32
    %1 = arith.addi %c0_i32, %c128_i32_0 : i32
    %c1_i32 = arith.constant 1 : i32
    scf.for %arg8 = %c0_i32 to %1 step %c1_i32  : i32 {
      %c1_i32_76 = arith.constant 1 : i32
      %106 = arith.muli %arg8, %c1_i32_76 : i32
      %c0_i32_77 = arith.constant 0 : i32
      %107 = arith.addi %c0_i32_77, %106 : i32
      %108 = arith.addi %0, %107 : i32
      %c8_i32 = arith.constant 8 : i32
      %109 = arith.muli %108, %c8_i32 : i32
      %c0_i32_78 = arith.constant 0 : i32
      %110 = arith.addi %109, %c0_i32_78 : i32
      %111 = arith.index_cast %110 : i32 to index
      %112 = memref.load %arg1[%111] : memref<2048xi32, #tpu.memory_space<smem>>
      %c0_i32_79 = arith.constant 0 : i32
      %113 = arith.addi %c0_i32_79, %107 : i32
      %c0_i32_80 = arith.constant 0 : i32
      %c0_i32_81 = arith.constant 0 : i32
      %114 = tpu.memref_slice %arg2[%112, %c0_i32_81] : memref<256x128xf32, #tpu.memory_space<any>> -> memref<1x128xf32, #tpu.memory_space<any>>
      %115 = tpu.memref_squeeze %114 : memref<1x128xf32, #tpu.memory_space<any>> -> memref<128xf32, #tpu.memory_space<any>>
      %c0_i32_82 = arith.constant 0 : i32
      %116 = tpu.memref_slice %arg6[%113, %c0_i32_82] : memref<1024x128xf32, #tpu.memory_space<vmem>> -> memref<1x128xf32, #tpu.memory_space<vmem>>
      %117 = tpu.memref_squeeze %116 : memref<1x128xf32, #tpu.memory_space<vmem>> -> memref<128xf32, #tpu.memory_space<vmem>>
      %118 = tpu.memref_slice %arg7[%c0_i32_80] : memref<8x!tpu.dma_semaphore, #tpu.memory_space<semaphore_mem>> -> memref<1x!tpu.dma_semaphore, #tpu.memory_space<semaphore_mem>>
      %119 = tpu.memref_squeeze %118 : memref<1x!tpu.dma_semaphore, #tpu.memory_space<semaphore_mem>> -> memref<!tpu.dma_semaphore, #tpu.memory_space<semaphore_mem>>
      tpu.enqueue_dma source(%115 : memref<128xf32, #tpu.memory_space<any>>) target(%117 : memref<128xf32, #tpu.memory_space<vmem>>) target_semaphore(%119 : memref<!tpu.dma_semaphore, #tpu.memory_space<semaphore_mem>>)
    }
    %c128_i32_1 = arith.constant 128 : i32
    %c0_i32_2 = arith.constant 0 : i32
    %c128_i32_3 = arith.constant 128 : i32
    %2 = arith.addi %c0_i32_2, %c128_i32_3 : i32
    %c1_i32_4 = arith.constant 1 : i32
    scf.for %arg8 = %c0_i32_2 to %2 step %c1_i32_4  : i32 {
      %c1_i32_76 = arith.constant 1 : i32
      %106 = arith.muli %arg8, %c1_i32_76 : i32
      %c0_i32_77 = arith.constant 0 : i32
      %107 = arith.addi %c0_i32_77, %106 : i32
      %108 = arith.addi %0, %107 : i32
      %c8_i32 = arith.constant 8 : i32
      %109 = arith.muli %108, %c8_i32 : i32
      %c1_i32_78 = arith.constant 1 : i32
      %110 = arith.addi %109, %c1_i32_78 : i32
      %111 = arith.index_cast %110 : i32 to index
      %112 = memref.load %arg1[%111] : memref<2048xi32, #tpu.memory_space<smem>>
      %c128_i32_79 = arith.constant 128 : i32
      %113 = arith.addi %c128_i32_79, %107 : i32
      %c1_i32_80 = arith.constant 1 : i32
      %c0_i32_81 = arith.constant 0 : i32
      %114 = tpu.memref_slice %arg2[%112, %c0_i32_81] : memref<256x128xf32, #tpu.memory_space<any>> -> memref<1x128xf32, #tpu.memory_space<any>>
      %115 = tpu.memref_squeeze %114 : memref<1x128xf32, #tpu.memory_space<any>> -> memref<128xf32, #tpu.memory_space<any>>
      %c0_i32_82 = arith.constant 0 : i32
      %116 = tpu.memref_slice %arg6[%113, %c0_i32_82] : memref<1024x128xf32, #tpu.memory_space<vmem>> -> memref<1x128xf32, #tpu.memory_space<vmem>>
      %117 = tpu.memref_squeeze %116 : memref<1x128xf32, #tpu.memory_space<vmem>> -> memref<128xf32, #tpu.memory_space<vmem>>
      %118 = tpu.memref_slice %arg7[%c1_i32_80] : memref<8x!tpu.dma_semaphore, #tpu.memory_space<semaphore_mem>> -> memref<1x!tpu.dma_semaphore, #tpu.memory_space<semaphore_mem>>
      %119 = tpu.memref_squeeze %118 : memref<1x!tpu.dma_semaphore, #tpu.memory_space<semaphore_mem>> -> memref<!tpu.dma_semaphore, #tpu.memory_space<semaphore_mem>>
      tpu.enqueue_dma source(%115 : memref<128xf32, #tpu.memory_space<any>>) target(%117 : memref<128xf32, #tpu.memory_space<vmem>>) target_semaphore(%119 : memref<!tpu.dma_semaphore, #tpu.memory_space<semaphore_mem>>)
    }
    %c128_i32_5 = arith.constant 128 : i32
    %c0 = arith.constant 0 : index
    %c0_6 = arith.constant 0 : index
    %3 = vector.load %arg3[%c0, %c0_6] : memref<128x8xf32, #tpu.memory_space<vmem>>, vector<128x8xf32>
    %c0_7 = arith.constant 0 : index
    %c0_8 = arith.constant 0 : index
    %4 = vector.load %arg4[%c0_7, %c0_8] : memref<128x1xi32, #tpu.memory_space<vmem>>, vector<128x1xi32>
    %5 = arith.sitofp %4 : vector<128x1xi32> to vector<128x1xf32>
    %6 = tpu.iota {dimensions = array<i32: 1>} : vector<128x8xi32>
    %7 = vector.broadcast %4 : vector<128x1xi32> to vector<128x8xi32>
    %8 = arith.cmpi slt, %6, %7 : vector<128x8xi32>
    %9 = arith.extui %8 : vector<128x8xi1> to vector<128x8xi32>
    %10 = arith.sitofp %9 : vector<128x8xi32> to vector<128x8xf32>
    %cst = arith.constant dense<0.000000e+00> : vector<128xf32>
    %11 = vector.multi_reduction <add>, %3, %cst [1] : vector<128x8xf32> to vector<128xf32>
    %12 = vector.shape_cast %11 : vector<128xf32> to vector<128x1xf32>
    %cst_9 = arith.constant 0.000000e+00 : f32
    %13 = vector.broadcast %cst_9 : f32 to vector<128x1xf32>
    %14 = arith.cmpf one, %12, %13 : vector<128x1xf32>
    %cst_10 = arith.constant 1.000000e+00 : f32
    %15 = vector.broadcast %cst_10 : f32 to vector<128x1xf32>
    %16 = arith.select %14, %12, %15 : vector<128x1xi1>, vector<128x1xf32>
    %17 = vector.broadcast %16 : vector<128x1xf32> to vector<128x8xf32>
    %18 = arith.divf %3, %17 : vector<128x8xf32>
    %cst_11 = arith.constant 1.000000e+00 : f32
    %19 = vector.broadcast %cst_11 : f32 to vector<128x1xf32>
    %20 = arith.maximumf %5, %19 : vector<128x1xf32>
    %21 = vector.broadcast %20 : vector<128x1xf32> to vector<128x8xf32>
    %22 = arith.divf %10, %21 : vector<128x8xf32>
    %23 = vector.shape_cast %14 : vector<128x1xi1> to vector<128x1xi1>
    %24 = vector.broadcast %23 : vector<128x1xi1> to vector<128x8xi1>
    %25 = arith.select %24, %18, %22 : vector<128x8xi1>, vector<128x8xf32>
    %cst_12 = arith.constant 0.000000e+00 : f32
    %26 = vector.broadcast %cst_12 : f32 to vector<128x128xf32>
    %c0_i32_13 = arith.constant 0 : i32
    %c128_i32_14 = arith.constant 128 : i32
    %27 = arith.addi %c0_i32_13, %c128_i32_14 : i32
    %c1_i32_15 = arith.constant 1 : i32
    scf.for %arg8 = %c0_i32_13 to %27 step %c1_i32_15  : i32 {
      %c1_i32_76 = arith.constant 1 : i32
      %106 = arith.muli %arg8, %c1_i32_76 : i32
      %c0_i32_77 = arith.constant 0 : i32
      %107 = arith.addi %c0_i32_77, %106 : i32
      %108 = arith.addi %0, %107 : i32
      %c8_i32 = arith.constant 8 : i32
      %109 = arith.muli %108, %c8_i32 : i32
      %c2_i32_78 = arith.constant 2 : i32
      %110 = arith.addi %109, %c2_i32_78 : i32
      %111 = arith.index_cast %110 : i32 to index
      %112 = memref.load %arg1[%111] : memref<2048xi32, #tpu.memory_space<smem>>
      %c256_i32_79 = arith.constant 256 : i32
      %113 = arith.addi %c256_i32_79, %107 : i32
      %c2_i32_80 = arith.constant 2 : i32
      %c0_i32_81 = arith.constant 0 : i32
      %114 = tpu.memref_slice %arg2[%112, %c0_i32_81] : memref<256x128xf32, #tpu.memory_space<any>> -> memref<1x128xf32, #tpu.memory_space<any>>
      %115 = tpu.memref_squeeze %114 : memref<1x128xf32, #tpu.memory_space<any>> -> memref<128xf32, #tpu.memory_space<any>>
      %c0_i32_82 = arith.constant 0 : i32
      %116 = tpu.memref_slice %arg6[%113, %c0_i32_82] : memref<1024x128xf32, #tpu.memory_space<vmem>> -> memref<1x128xf32, #tpu.memory_space<vmem>>
      %117 = tpu.memref_squeeze %116 : memref<1x128xf32, #tpu.memory_space<vmem>> -> memref<128xf32, #tpu.memory_space<vmem>>
      %118 = tpu.memref_slice %arg7[%c2_i32_80] : memref<8x!tpu.dma_semaphore, #tpu.memory_space<semaphore_mem>> -> memref<1x!tpu.dma_semaphore, #tpu.memory_space<semaphore_mem>>
      %119 = tpu.memref_squeeze %118 : memref<1x!tpu.dma_semaphore, #tpu.memory_space<semaphore_mem>> -> memref<!tpu.dma_semaphore, #tpu.memory_space<semaphore_mem>>
      tpu.enqueue_dma source(%115 : memref<128xf32, #tpu.memory_space<any>>) target(%117 : memref<128xf32, #tpu.memory_space<vmem>>) target_semaphore(%119 : memref<!tpu.dma_semaphore, #tpu.memory_space<semaphore_mem>>)
    }
    %c128_i32_16 = arith.constant 128 : i32
    %c0_i32_17 = arith.constant 0 : i32
    %c0_i32_18 = arith.constant 0 : i32
    %c0_i32_19 = arith.constant 0 : i32
    %28 = tpu.memref_slice %arg6[%c0_i32_18, %c0_i32_19] : memref<1024x128xf32, #tpu.memory_space<vmem>> -> memref<128x128xf32, #tpu.memory_space<vmem>>
    %c0_i32_20 = arith.constant 0 : i32
    %c0_i32_21 = arith.constant 0 : i32
    %29 = tpu.memref_slice %arg6[%c0_i32_20, %c0_i32_21] : memref<1024x128xf32, #tpu.memory_space<vmem>> -> memref<128x128xf32, #tpu.memory_space<vmem>>
    %30 = tpu.memref_slice %arg7[%c0_i32_17] : memref<8x!tpu.dma_semaphore, #tpu.memory_space<semaphore_mem>> -> memref<1x!tpu.dma_semaphore, #tpu.memory_space<semaphore_mem>>
    %31 = tpu.memref_squeeze %30 : memref<1x!tpu.dma_semaphore, #tpu.memory_space<semaphore_mem>> -> memref<!tpu.dma_semaphore, #tpu.memory_space<semaphore_mem>>
    tpu.wait_dma2 semaphore(%31 : memref<!tpu.dma_semaphore, #tpu.memory_space<semaphore_mem>>) src(%28 : memref<128x128xf32, #tpu.memory_space<vmem>>) dst(%29 : memref<128x128xf32, #tpu.memory_space<vmem>>)
    %32 = vector.extract_strided_slice %25 {offsets = [0, 0], sizes = [128, 1], strides = [1, 1]} : vector<128x8xf32> to vector<128x1xf32>
    %c0_22 = arith.constant 0 : index
    %c0_23 = arith.constant 0 : index
    %33 = vector.load %arg6[%c0_22, %c0_23] : memref<1024x128xf32, #tpu.memory_space<vmem>>, vector<128x128xf32>
    %34 = vector.broadcast %32 : vector<128x1xf32> to vector<128x128xf32>
    %35 = arith.mulf %34, %33 : vector<128x128xf32>
    %36 = arith.addf %26, %35 : vector<128x128xf32>
    %c0_i32_24 = arith.constant 0 : i32
    %c128_i32_25 = arith.constant 128 : i32
    %37 = arith.addi %c0_i32_24, %c128_i32_25 : i32
    %c1_i32_26 = arith.constant 1 : i32
    scf.for %arg8 = %c0_i32_24 to %37 step %c1_i32_26  : i32 {
      %c1_i32_76 = arith.constant 1 : i32
      %106 = arith.muli %arg8, %c1_i32_76 : i32
      %c0_i32_77 = arith.constant 0 : i32
      %107 = arith.addi %c0_i32_77, %106 : i32
      %108 = arith.addi %0, %107 : i32
      %c8_i32 = arith.constant 8 : i32
      %109 = arith.muli %108, %c8_i32 : i32
      %c3_i32_78 = arith.constant 3 : i32
      %110 = arith.addi %109, %c3_i32_78 : i32
      %111 = arith.index_cast %110 : i32 to index
      %112 = memref.load %arg1[%111] : memref<2048xi32, #tpu.memory_space<smem>>
      %c384_i32_79 = arith.constant 384 : i32
      %113 = arith.addi %c384_i32_79, %107 : i32
      %c3_i32_80 = arith.constant 3 : i32
      %c0_i32_81 = arith.constant 0 : i32
      %114 = tpu.memref_slice %arg2[%112, %c0_i32_81] : memref<256x128xf32, #tpu.memory_space<any>> -> memref<1x128xf32, #tpu.memory_space<any>>
      %115 = tpu.memref_squeeze %114 : memref<1x128xf32, #tpu.memory_space<any>> -> memref<128xf32, #tpu.memory_space<any>>
      %c0_i32_82 = arith.constant 0 : i32
      %116 = tpu.memref_slice %arg6[%113, %c0_i32_82] : memref<1024x128xf32, #tpu.memory_space<vmem>> -> memref<1x128xf32, #tpu.memory_space<vmem>>
      %117 = tpu.memref_squeeze %116 : memref<1x128xf32, #tpu.memory_space<vmem>> -> memref<128xf32, #tpu.memory_space<vmem>>
      %118 = tpu.memref_slice %arg7[%c3_i32_80] : memref<8x!tpu.dma_semaphore, #tpu.memory_space<semaphore_mem>> -> memref<1x!tpu.dma_semaphore, #tpu.memory_space<semaphore_mem>>
      %119 = tpu.memref_squeeze %118 : memref<1x!tpu.dma_semaphore, #tpu.memory_space<semaphore_mem>> -> memref<!tpu.dma_semaphore, #tpu.memory_space<semaphore_mem>>
      tpu.enqueue_dma source(%115 : memref<128xf32, #tpu.memory_space<any>>) target(%117 : memref<128xf32, #tpu.memory_space<vmem>>) target_semaphore(%119 : memref<!tpu.dma_semaphore, #tpu.memory_space<semaphore_mem>>)
    }
    %c128_i32_27 = arith.constant 128 : i32
    %c1_i32_28 = arith.constant 1 : i32
    %c128_i32_29 = arith.constant 128 : i32
    %c0_i32_30 = arith.constant 0 : i32
    %38 = tpu.memref_slice %arg6[%c128_i32_29, %c0_i32_30] : memref<1024x128xf32, #tpu.memory_space<vmem>> -> memref<128x128xf32, #tpu.memory_space<vmem>>
    %c128_i32_31 = arith.constant 128 : i32
    %c0_i32_32 = arith.constant 0 : i32
    %39 = tpu.memref_slice %arg6[%c128_i32_31, %c0_i32_32] : memref<1024x128xf32, #tpu.memory_space<vmem>> -> memref<128x128xf32, #tpu.memory_space<vmem>>
    %40 = tpu.memref_slice %arg7[%c1_i32_28] : memref<8x!tpu.dma_semaphore, #tpu.memory_space<semaphore_mem>> -> memref<1x!tpu.dma_semaphore, #tpu.memory_space<semaphore_mem>>
    %41 = tpu.memref_squeeze %40 : memref<1x!tpu.dma_semaphore, #tpu.memory_space<semaphore_mem>> -> memref<!tpu.dma_semaphore, #tpu.memory_space<semaphore_mem>>
    tpu.wait_dma2 semaphore(%41 : memref<!tpu.dma_semaphore, #tpu.memory_space<semaphore_mem>>) src(%38 : memref<128x128xf32, #tpu.memory_space<vmem>>) dst(%39 : memref<128x128xf32, #tpu.memory_space<vmem>>)
    %42 = vector.extract_strided_slice %25 {offsets = [0, 1], sizes = [128, 1], strides = [1, 1]} : vector<128x8xf32> to vector<128x1xf32>
    %c128 = arith.constant 128 : index
    %c0_33 = arith.constant 0 : index
    %43 = vector.load %arg6[%c128, %c0_33] : memref<1024x128xf32, #tpu.memory_space<vmem>>, vector<128x128xf32>
    %44 = vector.broadcast %42 : vector<128x1xf32> to vector<128x128xf32>
    %45 = arith.mulf %44, %43 : vector<128x128xf32>
    %46 = arith.addf %36, %45 : vector<128x128xf32>
    %c0_i32_34 = arith.constant 0 : i32
    %c128_i32_35 = arith.constant 128 : i32
    %47 = arith.addi %c0_i32_34, %c128_i32_35 : i32
    %c1_i32_36 = arith.constant 1 : i32
    scf.for %arg8 = %c0_i32_34 to %47 step %c1_i32_36  : i32 {
      %c1_i32_76 = arith.constant 1 : i32
      %106 = arith.muli %arg8, %c1_i32_76 : i32
      %c0_i32_77 = arith.constant 0 : i32
      %107 = arith.addi %c0_i32_77, %106 : i32
      %108 = arith.addi %0, %107 : i32
      %c8_i32 = arith.constant 8 : i32
      %109 = arith.muli %108, %c8_i32 : i32
      %c4_i32_78 = arith.constant 4 : i32
      %110 = arith.addi %109, %c4_i32_78 : i32
      %111 = arith.index_cast %110 : i32 to index
      %112 = memref.load %arg1[%111] : memref<2048xi32, #tpu.memory_space<smem>>
      %c512_i32_79 = arith.constant 512 : i32
      %113 = arith.addi %c512_i32_79, %107 : i32
      %c4_i32_80 = arith.constant 4 : i32
      %c0_i32_81 = arith.constant 0 : i32
      %114 = tpu.memref_slice %arg2[%112, %c0_i32_81] : memref<256x128xf32, #tpu.memory_space<any>> -> memref<1x128xf32, #tpu.memory_space<any>>
      %115 = tpu.memref_squeeze %114 : memref<1x128xf32, #tpu.memory_space<any>> -> memref<128xf32, #tpu.memory_space<any>>
      %c0_i32_82 = arith.constant 0 : i32
      %116 = tpu.memref_slice %arg6[%113, %c0_i32_82] : memref<1024x128xf32, #tpu.memory_space<vmem>> -> memref<1x128xf32, #tpu.memory_space<vmem>>
      %117 = tpu.memref_squeeze %116 : memref<1x128xf32, #tpu.memory_space<vmem>> -> memref<128xf32, #tpu.memory_space<vmem>>
      %118 = tpu.memref_slice %arg7[%c4_i32_80] : memref<8x!tpu.dma_semaphore, #tpu.memory_space<semaphore_mem>> -> memref<1x!tpu.dma_semaphore, #tpu.memory_space<semaphore_mem>>
      %119 = tpu.memref_squeeze %118 : memref<1x!tpu.dma_semaphore, #tpu.memory_space<semaphore_mem>> -> memref<!tpu.dma_semaphore, #tpu.memory_space<semaphore_mem>>
      tpu.enqueue_dma source(%115 : memref<128xf32, #tpu.memory_space<any>>) target(%117 : memref<128xf32, #tpu.memory_space<vmem>>) target_semaphore(%119 : memref<!tpu.dma_semaphore, #tpu.memory_space<semaphore_mem>>)
    }
    %c128_i32_37 = arith.constant 128 : i32
    %c2_i32 = arith.constant 2 : i32
    %c256_i32 = arith.constant 256 : i32
    %c0_i32_38 = arith.constant 0 : i32
    %48 = tpu.memref_slice %arg6[%c256_i32, %c0_i32_38] : memref<1024x128xf32, #tpu.memory_space<vmem>> -> memref<128x128xf32, #tpu.memory_space<vmem>>
    %c256_i32_39 = arith.constant 256 : i32
    %c0_i32_40 = arith.constant 0 : i32
    %49 = tpu.memref_slice %arg6[%c256_i32_39, %c0_i32_40] : memref<1024x128xf32, #tpu.memory_space<vmem>> -> memref<128x128xf32, #tpu.memory_space<vmem>>
    %50 = tpu.memref_slice %arg7[%c2_i32] : memref<8x!tpu.dma_semaphore, #tpu.memory_space<semaphore_mem>> -> memref<1x!tpu.dma_semaphore, #tpu.memory_space<semaphore_mem>>
    %51 = tpu.memref_squeeze %50 : memref<1x!tpu.dma_semaphore, #tpu.memory_space<semaphore_mem>> -> memref<!tpu.dma_semaphore, #tpu.memory_space<semaphore_mem>>
    tpu.wait_dma2 semaphore(%51 : memref<!tpu.dma_semaphore, #tpu.memory_space<semaphore_mem>>) src(%48 : memref<128x128xf32, #tpu.memory_space<vmem>>) dst(%49 : memref<128x128xf32, #tpu.memory_space<vmem>>)
    %52 = vector.extract_strided_slice %25 {offsets = [0, 2], sizes = [128, 1], strides = [1, 1]} : vector<128x8xf32> to vector<128x1xf32>
    %c256 = arith.constant 256 : index
    %c0_41 = arith.constant 0 : index
    %53 = vector.load %arg6[%c256, %c0_41] : memref<1024x128xf32, #tpu.memory_space<vmem>>, vector<128x128xf32>
    %54 = vector.broadcast %52 : vector<128x1xf32> to vector<128x128xf32>
    %55 = arith.mulf %54, %53 : vector<128x128xf32>
    %56 = arith.addf %46, %55 : vector<128x128xf32>
    %c0_i32_42 = arith.constant 0 : i32
    %c128_i32_43 = arith.constant 128 : i32
    %57 = arith.addi %c0_i32_42, %c128_i32_43 : i32
    %c1_i32_44 = arith.constant 1 : i32
    scf.for %arg8 = %c0_i32_42 to %57 step %c1_i32_44  : i32 {
      %c1_i32_76 = arith.constant 1 : i32
      %106 = arith.muli %arg8, %c1_i32_76 : i32
      %c0_i32_77 = arith.constant 0 : i32
      %107 = arith.addi %c0_i32_77, %106 : i32
      %108 = arith.addi %0, %107 : i32
      %c8_i32 = arith.constant 8 : i32
      %109 = arith.muli %108, %c8_i32 : i32
      %c5_i32_78 = arith.constant 5 : i32
      %110 = arith.addi %109, %c5_i32_78 : i32
      %111 = arith.index_cast %110 : i32 to index
      %112 = memref.load %arg1[%111] : memref<2048xi32, #tpu.memory_space<smem>>
      %c640_i32_79 = arith.constant 640 : i32
      %113 = arith.addi %c640_i32_79, %107 : i32
      %c5_i32_80 = arith.constant 5 : i32
      %c0_i32_81 = arith.constant 0 : i32
      %114 = tpu.memref_slice %arg2[%112, %c0_i32_81] : memref<256x128xf32, #tpu.memory_space<any>> -> memref<1x128xf32, #tpu.memory_space<any>>
      %115 = tpu.memref_squeeze %114 : memref<1x128xf32, #tpu.memory_space<any>> -> memref<128xf32, #tpu.memory_space<any>>
      %c0_i32_82 = arith.constant 0 : i32
      %116 = tpu.memref_slice %arg6[%113, %c0_i32_82] : memref<1024x128xf32, #tpu.memory_space<vmem>> -> memref<1x128xf32, #tpu.memory_space<vmem>>
      %117 = tpu.memref_squeeze %116 : memref<1x128xf32, #tpu.memory_space<vmem>> -> memref<128xf32, #tpu.memory_space<vmem>>
      %118 = tpu.memref_slice %arg7[%c5_i32_80] : memref<8x!tpu.dma_semaphore, #tpu.memory_space<semaphore_mem>> -> memref<1x!tpu.dma_semaphore, #tpu.memory_space<semaphore_mem>>
      %119 = tpu.memref_squeeze %118 : memref<1x!tpu.dma_semaphore, #tpu.memory_space<semaphore_mem>> -> memref<!tpu.dma_semaphore, #tpu.memory_space<semaphore_mem>>
      tpu.enqueue_dma source(%115 : memref<128xf32, #tpu.memory_space<any>>) target(%117 : memref<128xf32, #tpu.memory_space<vmem>>) target_semaphore(%119 : memref<!tpu.dma_semaphore, #tpu.memory_space<semaphore_mem>>)
    }
    %c128_i32_45 = arith.constant 128 : i32
    %c3_i32 = arith.constant 3 : i32
    %c384_i32 = arith.constant 384 : i32
    %c0_i32_46 = arith.constant 0 : i32
    %58 = tpu.memref_slice %arg6[%c384_i32, %c0_i32_46] : memref<1024x128xf32, #tpu.memory_space<vmem>> -> memref<128x128xf32, #tpu.memory_space<vmem>>
    %c384_i32_47 = arith.constant 384 : i32
    %c0_i32_48 = arith.constant 0 : i32
    %59 = tpu.memref_slice %arg6[%c384_i32_47, %c0_i32_48] : memref<1024x128xf32, #tpu.memory_space<vmem>> -> memref<128x128xf32, #tpu.memory_space<vmem>>
    %60 = tpu.memref_slice %arg7[%c3_i32] : memref<8x!tpu.dma_semaphore, #tpu.memory_space<semaphore_mem>> -> memref<1x!tpu.dma_semaphore, #tpu.memory_space<semaphore_mem>>
    %61 = tpu.memref_squeeze %60 : memref<1x!tpu.dma_semaphore, #tpu.memory_space<semaphore_mem>> -> memref<!tpu.dma_semaphore, #tpu.memory_space<semaphore_mem>>
    tpu.wait_dma2 semaphore(%61 : memref<!tpu.dma_semaphore, #tpu.memory_space<semaphore_mem>>) src(%58 : memref<128x128xf32, #tpu.memory_space<vmem>>) dst(%59 : memref<128x128xf32, #tpu.memory_space<vmem>>)
    %62 = vector.extract_strided_slice %25 {offsets = [0, 3], sizes = [128, 1], strides = [1, 1]} : vector<128x8xf32> to vector<128x1xf32>
    %c384 = arith.constant 384 : index
    %c0_49 = arith.constant 0 : index
    %63 = vector.load %arg6[%c384, %c0_49] : memref<1024x128xf32, #tpu.memory_space<vmem>>, vector<128x128xf32>
    %64 = vector.broadcast %62 : vector<128x1xf32> to vector<128x128xf32>
    %65 = arith.mulf %64, %63 : vector<128x128xf32>
    %66 = arith.addf %56, %65 : vector<128x128xf32>
    %c0_i32_50 = arith.constant 0 : i32
    %c128_i32_51 = arith.constant 128 : i32
    %67 = arith.addi %c0_i32_50, %c128_i32_51 : i32
    %c1_i32_52 = arith.constant 1 : i32
    scf.for %arg8 = %c0_i32_50 to %67 step %c1_i32_52  : i32 {
      %c1_i32_76 = arith.constant 1 : i32
      %106 = arith.muli %arg8, %c1_i32_76 : i32
      %c0_i32_77 = arith.constant 0 : i32
      %107 = arith.addi %c0_i32_77, %106 : i32
      %108 = arith.addi %0, %107 : i32
      %c8_i32 = arith.constant 8 : i32
      %109 = arith.muli %108, %c8_i32 : i32
      %c6_i32_78 = arith.constant 6 : i32
      %110 = arith.addi %109, %c6_i32_78 : i32
      %111 = arith.index_cast %110 : i32 to index
      %112 = memref.load %arg1[%111] : memref<2048xi32, #tpu.memory_space<smem>>
      %c768_i32_79 = arith.constant 768 : i32
      %113 = arith.addi %c768_i32_79, %107 : i32
      %c6_i32_80 = arith.constant 6 : i32
      %c0_i32_81 = arith.constant 0 : i32
      %114 = tpu.memref_slice %arg2[%112, %c0_i32_81] : memref<256x128xf32, #tpu.memory_space<any>> -> memref<1x128xf32, #tpu.memory_space<any>>
      %115 = tpu.memref_squeeze %114 : memref<1x128xf32, #tpu.memory_space<any>> -> memref<128xf32, #tpu.memory_space<any>>
      %c0_i32_82 = arith.constant 0 : i32
      %116 = tpu.memref_slice %arg6[%113, %c0_i32_82] : memref<1024x128xf32, #tpu.memory_space<vmem>> -> memref<1x128xf32, #tpu.memory_space<vmem>>
      %117 = tpu.memref_squeeze %116 : memref<1x128xf32, #tpu.memory_space<vmem>> -> memref<128xf32, #tpu.memory_space<vmem>>
      %118 = tpu.memref_slice %arg7[%c6_i32_80] : memref<8x!tpu.dma_semaphore, #tpu.memory_space<semaphore_mem>> -> memref<1x!tpu.dma_semaphore, #tpu.memory_space<semaphore_mem>>
      %119 = tpu.memref_squeeze %118 : memref<1x!tpu.dma_semaphore, #tpu.memory_space<semaphore_mem>> -> memref<!tpu.dma_semaphore, #tpu.memory_space<semaphore_mem>>
      tpu.enqueue_dma source(%115 : memref<128xf32, #tpu.memory_space<any>>) target(%117 : memref<128xf32, #tpu.memory_space<vmem>>) target_semaphore(%119 : memref<!tpu.dma_semaphore, #tpu.memory_space<semaphore_mem>>)
    }
    %c128_i32_53 = arith.constant 128 : i32
    %c4_i32 = arith.constant 4 : i32
    %c512_i32 = arith.constant 512 : i32
    %c0_i32_54 = arith.constant 0 : i32
    %68 = tpu.memref_slice %arg6[%c512_i32, %c0_i32_54] : memref<1024x128xf32, #tpu.memory_space<vmem>> -> memref<128x128xf32, #tpu.memory_space<vmem>>
    %c512_i32_55 = arith.constant 512 : i32
    %c0_i32_56 = arith.constant 0 : i32
    %69 = tpu.memref_slice %arg6[%c512_i32_55, %c0_i32_56] : memref<1024x128xf32, #tpu.memory_space<vmem>> -> memref<128x128xf32, #tpu.memory_space<vmem>>
    %70 = tpu.memref_slice %arg7[%c4_i32] : memref<8x!tpu.dma_semaphore, #tpu.memory_space<semaphore_mem>> -> memref<1x!tpu.dma_semaphore, #tpu.memory_space<semaphore_mem>>
    %71 = tpu.memref_squeeze %70 : memref<1x!tpu.dma_semaphore, #tpu.memory_space<semaphore_mem>> -> memref<!tpu.dma_semaphore, #tpu.memory_space<semaphore_mem>>
    tpu.wait_dma2 semaphore(%71 : memref<!tpu.dma_semaphore, #tpu.memory_space<semaphore_mem>>) src(%68 : memref<128x128xf32, #tpu.memory_space<vmem>>) dst(%69 : memref<128x128xf32, #tpu.memory_space<vmem>>)
    %72 = vector.extract_strided_slice %25 {offsets = [0, 4], sizes = [128, 1], strides = [1, 1]} : vector<128x8xf32> to vector<128x1xf32>
    %c512 = arith.constant 512 : index
    %c0_57 = arith.constant 0 : index
    %73 = vector.load %arg6[%c512, %c0_57] : memref<1024x128xf32, #tpu.memory_space<vmem>>, vector<128x128xf32>
    %74 = vector.broadcast %72 : vector<128x1xf32> to vector<128x128xf32>
    %75 = arith.mulf %74, %73 : vector<128x128xf32>
    %76 = arith.addf %66, %75 : vector<128x128xf32>
    %c0_i32_58 = arith.constant 0 : i32
    %c128_i32_59 = arith.constant 128 : i32
    %77 = arith.addi %c0_i32_58, %c128_i32_59 : i32
    %c1_i32_60 = arith.constant 1 : i32
    scf.for %arg8 = %c0_i32_58 to %77 step %c1_i32_60  : i32 {
      %c1_i32_76 = arith.constant 1 : i32
      %106 = arith.muli %arg8, %c1_i32_76 : i32
      %c0_i32_77 = arith.constant 0 : i32
      %107 = arith.addi %c0_i32_77, %106 : i32
      %108 = arith.addi %0, %107 : i32
      %c8_i32 = arith.constant 8 : i32
      %109 = arith.muli %108, %c8_i32 : i32
      %c7_i32_78 = arith.constant 7 : i32
      %110 = arith.addi %109, %c7_i32_78 : i32
      %111 = arith.index_cast %110 : i32 to index
      %112 = memref.load %arg1[%111] : memref<2048xi32, #tpu.memory_space<smem>>
      %c896_i32_79 = arith.constant 896 : i32
      %113 = arith.addi %c896_i32_79, %107 : i32
      %c7_i32_80 = arith.constant 7 : i32
      %c0_i32_81 = arith.constant 0 : i32
      %114 = tpu.memref_slice %arg2[%112, %c0_i32_81] : memref<256x128xf32, #tpu.memory_space<any>> -> memref<1x128xf32, #tpu.memory_space<any>>
      %115 = tpu.memref_squeeze %114 : memref<1x128xf32, #tpu.memory_space<any>> -> memref<128xf32, #tpu.memory_space<any>>
      %c0_i32_82 = arith.constant 0 : i32
      %116 = tpu.memref_slice %arg6[%113, %c0_i32_82] : memref<1024x128xf32, #tpu.memory_space<vmem>> -> memref<1x128xf32, #tpu.memory_space<vmem>>
      %117 = tpu.memref_squeeze %116 : memref<1x128xf32, #tpu.memory_space<vmem>> -> memref<128xf32, #tpu.memory_space<vmem>>
      %118 = tpu.memref_slice %arg7[%c7_i32_80] : memref<8x!tpu.dma_semaphore, #tpu.memory_space<semaphore_mem>> -> memref<1x!tpu.dma_semaphore, #tpu.memory_space<semaphore_mem>>
      %119 = tpu.memref_squeeze %118 : memref<1x!tpu.dma_semaphore, #tpu.memory_space<semaphore_mem>> -> memref<!tpu.dma_semaphore, #tpu.memory_space<semaphore_mem>>
      tpu.enqueue_dma source(%115 : memref<128xf32, #tpu.memory_space<any>>) target(%117 : memref<128xf32, #tpu.memory_space<vmem>>) target_semaphore(%119 : memref<!tpu.dma_semaphore, #tpu.memory_space<semaphore_mem>>)
    }
    %c128_i32_61 = arith.constant 128 : i32
    %c5_i32 = arith.constant 5 : i32
    %c640_i32 = arith.constant 640 : i32
    %c0_i32_62 = arith.constant 0 : i32
    %78 = tpu.memref_slice %arg6[%c640_i32, %c0_i32_62] : memref<1024x128xf32, #tpu.memory_space<vmem>> -> memref<128x128xf32, #tpu.memory_space<vmem>>
    %c640_i32_63 = arith.constant 640 : i32
    %c0_i32_64 = arith.constant 0 : i32
    %79 = tpu.memref_slice %arg6[%c640_i32_63, %c0_i32_64] : memref<1024x128xf32, #tpu.memory_space<vmem>> -> memref<128x128xf32, #tpu.memory_space<vmem>>
    %80 = tpu.memref_slice %arg7[%c5_i32] : memref<8x!tpu.dma_semaphore, #tpu.memory_space<semaphore_mem>> -> memref<1x!tpu.dma_semaphore, #tpu.memory_space<semaphore_mem>>
    %81 = tpu.memref_squeeze %80 : memref<1x!tpu.dma_semaphore, #tpu.memory_space<semaphore_mem>> -> memref<!tpu.dma_semaphore, #tpu.memory_space<semaphore_mem>>
    tpu.wait_dma2 semaphore(%81 : memref<!tpu.dma_semaphore, #tpu.memory_space<semaphore_mem>>) src(%78 : memref<128x128xf32, #tpu.memory_space<vmem>>) dst(%79 : memref<128x128xf32, #tpu.memory_space<vmem>>)
    %82 = vector.extract_strided_slice %25 {offsets = [0, 5], sizes = [128, 1], strides = [1, 1]} : vector<128x8xf32> to vector<128x1xf32>
    %c640 = arith.constant 640 : index
    %c0_65 = arith.constant 0 : index
    %83 = vector.load %arg6[%c640, %c0_65] : memref<1024x128xf32, #tpu.memory_space<vmem>>, vector<128x128xf32>
    %84 = vector.broadcast %82 : vector<128x1xf32> to vector<128x128xf32>
    %85 = arith.mulf %84, %83 : vector<128x128xf32>
    %86 = arith.addf %76, %85 : vector<128x128xf32>
    %c6_i32 = arith.constant 6 : i32
    %c768_i32 = arith.constant 768 : i32
    %c0_i32_66 = arith.constant 0 : i32
    %87 = tpu.memref_slice %arg6[%c768_i32, %c0_i32_66] : memref<1024x128xf32, #tpu.memory_space<vmem>> -> memref<128x128xf32, #tpu.memory_space<vmem>>
    %c768_i32_67 = arith.constant 768 : i32
    %c0_i32_68 = arith.constant 0 : i32
    %88 = tpu.memref_slice %arg6[%c768_i32_67, %c0_i32_68] : memref<1024x128xf32, #tpu.memory_space<vmem>> -> memref<128x128xf32, #tpu.memory_space<vmem>>
    %89 = tpu.memref_slice %arg7[%c6_i32] : memref<8x!tpu.dma_semaphore, #tpu.memory_space<semaphore_mem>> -> memref<1x!tpu.dma_semaphore, #tpu.memory_space<semaphore_mem>>
    %90 = tpu.memref_squeeze %89 : memref<1x!tpu.dma_semaphore, #tpu.memory_space<semaphore_mem>> -> memref<!tpu.dma_semaphore, #tpu.memory_space<semaphore_mem>>
    tpu.wait_dma2 semaphore(%90 : memref<!tpu.dma_semaphore, #tpu.memory_space<semaphore_mem>>) src(%87 : memref<128x128xf32, #tpu.memory_space<vmem>>) dst(%88 : memref<128x128xf32, #tpu.memory_space<vmem>>)
    %91 = vector.extract_strided_slice %25 {offsets = [0, 6], sizes = [128, 1], strides = [1, 1]} : vector<128x8xf32> to vector<128x1xf32>
    %c768 = arith.constant 768 : index
    %c0_69 = arith.constant 0 : index
    %92 = vector.load %arg6[%c768, %c0_69] : memref<1024x128xf32, #tpu.memory_space<vmem>>, vector<128x128xf32>
    %93 = vector.broadcast %91 : vector<128x1xf32> to vector<128x128xf32>
    %94 = arith.mulf %93, %92 : vector<128x128xf32>
    %95 = arith.addf %86, %94 : vector<128x128xf32>
    %c7_i32 = arith.constant 7 : i32
    %c896_i32 = arith.constant 896 : i32
    %c0_i32_70 = arith.constant 0 : i32
    %96 = tpu.memref_slice %arg6[%c896_i32, %c0_i32_70] : memref<1024x128xf32, #tpu.memory_space<vmem>> -> memref<128x128xf32, #tpu.memory_space<vmem>>
    %c896_i32_71 = arith.constant 896 : i32
    %c0_i32_72 = arith.constant 0 : i32
    %97 = tpu.memref_slice %arg6[%c896_i32_71, %c0_i32_72] : memref<1024x128xf32, #tpu.memory_space<vmem>> -> memref<128x128xf32, #tpu.memory_space<vmem>>
    %98 = tpu.memref_slice %arg7[%c7_i32] : memref<8x!tpu.dma_semaphore, #tpu.memory_space<semaphore_mem>> -> memref<1x!tpu.dma_semaphore, #tpu.memory_space<semaphore_mem>>
    %99 = tpu.memref_squeeze %98 : memref<1x!tpu.dma_semaphore, #tpu.memory_space<semaphore_mem>> -> memref<!tpu.dma_semaphore, #tpu.memory_space<semaphore_mem>>
    tpu.wait_dma2 semaphore(%99 : memref<!tpu.dma_semaphore, #tpu.memory_space<semaphore_mem>>) src(%96 : memref<128x128xf32, #tpu.memory_space<vmem>>) dst(%97 : memref<128x128xf32, #tpu.memory_space<vmem>>)
    %100 = vector.extract_strided_slice %25 {offsets = [0, 7], sizes = [128, 1], strides = [1, 1]} : vector<128x8xf32> to vector<128x1xf32>
    %c896 = arith.constant 896 : index
    %c0_73 = arith.constant 0 : index
    %101 = vector.load %arg6[%c896, %c0_73] : memref<1024x128xf32, #tpu.memory_space<vmem>>, vector<128x128xf32>
    %102 = vector.broadcast %100 : vector<128x1xf32> to vector<128x128xf32>
    %103 = arith.mulf %102, %101 : vector<128x128xf32>
    %104 = arith.addf %95, %103 : vector<128x128xf32>
    %c0_74 = arith.constant 0 : index
    %c0_75 = arith.constant 0 : index
    %105 = vector.load %arg5[%c0_74, %c0_75] : memref<128x128xf32, #tpu.memory_space<vmem>>, vector<128x128xf32>
    tpu.vector_store %arg5[%c0_74, %c0_75], %104 {strides = array<i32>} : memref<128x128xf32, #tpu.memory_space<vmem>>, vector<128x128xf32>,
    return
  }
  func.func @transform_1(%arg0: i32, %arg1: memref<2048xi32, #tpu.memory_space<smem>>) -> (i32, i32) {
    %c0_i32 = arith.constant 0 : i32
    %c0_i32_0 = arith.constant 0 : i32
    return %arg0, %c0_i32 : i32, i32
  }
  func.func @transform_2(%arg0: i32, %arg1: memref<2048xi32, #tpu.memory_space<smem>>) -> (i32, i32) {
    %c0_i32 = arith.constant 0 : i32
    %c0_i32_0 = arith.constant 0 : i32
    return %arg0, %c0_i32 : i32, i32
  }
  func.func @transform_3(%arg0: i32, %arg1: memref<2048xi32, #tpu.memory_space<smem>>) -> (i32, i32) {
    %c0_i32 = arith.constant 0 : i32
    %c0_i32_0 = arith.constant 0 : i32
    return %arg0, %c0_i32 : i32, i32
  }
}

</mosaic_0001>

<llo_original>
// kernel: tpu_custom_call.1
$region0: #{tpu_custom_call.1}
  #allocation0 [shape = 'u32[]', space=smem, size = 0x4, offset = 0x4, fixed_abs, tag = 'smem constant byte address 0x4 - core index']
  #allocation1 [shape = 'u32[144,128]{1,0:T(1,128)}', space=vmem, size = 0x12000, scoped, tag = 'internal scratch']
  #allocation2 [shape = 'f32[1024,128]{1,0:T(8,128)}', space=vmem, size = 0x80000, scoped, tag = 'scratch operand']
  #allocation3 [shape = 's32[8]{0}', space=sflag, size = 0x20, scoped, tag = 'scratch operand']
  #allocation4 [shape = 's32[1]{0}', space=sflag, size = 0x4, scoped, tag = 'scoped memory for tpu_custom_call.1']
  #allocation5 [shape = 'u8[8192]{0}', space=smem, size = 0x2000, scoped, tag = 'prefetched SMEM operand 0']
  #allocation8 [shape = 's32[]', space=sflag, size = 0x4, offset = 0, fixed_abs, tag = 'sflag constant byte address 0x0 - dummy sync flag']
  #allocation9 [shape = 's32[]', space=sflag, size = 0x4, offset = 0, fixed_abs, tag = 'sflag constant byte address 0x0 - dummy sync flag']
  #allocation10 [shape = 's32[]', space=sflag, size = 0x4, offset = 0, fixed_abs, tag = 'sflag constant byte address 0x0 - dummy sync flag']
  #allocation11 [shape = 's32[]', space=sflag, size = 0x4, offset = 0, fixed_abs, tag = 'sflag constant byte address 0x0 - dummy sync flag']
  #allocation12 [shape = 's32[]', space=sflag, size = 0x4, offset = 0, fixed_abs, tag = 'sflag constant byte address 0x0 - dummy sync flag']
  #allocation13 [shape = 's32[]', space=sflag, size = 0x4, offset = 0, fixed_abs, tag = 'sflag constant byte address 0x0 - dummy sync flag']
  #allocation14 [shape = 's32[]', space=sflag, size = 0x4, offset = 0, fixed_abs, tag = 'sflag constant byte address 0x0 - dummy sync flag']
  #allocation15 [shape = 's32[]', space=sflag, size = 0x4, offset = 0, fixed_abs, tag = 'sflag constant byte address 0x0 - dummy sync flag']
  %s0 = inlined_call_operand.vmem [shape: s32[2048], index: 0, kind: input, shape index: {}]
  %s1 = inlined_call_operand.vmem [shape: f32[256,128], index: 1, kind: input, shape index: {}]
  %s2 = inlined_call_operand.vmem [shape: f32[256,8], index: 2, kind: input, shape index: {}]
  %s3 = inlined_call_operand.vmem [shape: s32[256,1], index: 3, kind: input, shape index: {}]
  %s4 = inlined_call_operand.hbm [shape: f32[256,128], index: 4, kind: output, shape index: {}]
  %s5 = sld [smem:[#allocation0]]
  $region337: #{tpu_custom_call.1} parent=0
    _
  %s7 = ssub.s32 1, %s5
  %s8 = scalar_select 0, %s7, %s5
  %s9 = sshll.u32 %s0, 4
  %s10 = int_to_ptr.vmem [resolvable:$true] %s9
  %12 = dma.vmem_to_smem %s10, 256, [#allocation5], [#allocation4]
  %13 = dma.done [#allocation4], 256
  %14 = sfence
  $region1: #{tpu_custom_call.1} parent=0
    #allocation6 [shape = 'u8[131072]{0}', space=vmem, size = 0x20000, scoped, tag = 'output window, operand 0']
    #allocation7 [shape = 's32[2]{0}', space=sflag, size = 0x8, scoped, tag = 'scoped memory for tpu_custom_call.1']
    %15 = vsyncpa [#allocation7], 0
    %s16 = scalar_lea.sflag [#allocation7], 1
    %17 = vsyncpa %s16, 0
    loop: start=0, step=1, limit=4
    $region2: #{tpu_custom_call.1} parent=1 // loop_pre_header
      _
    $region3: #{tpu_custom_call.1} parent=1 // loop_header
      %s19 = sphi 0, %s23
      %p20 = scmp.ge.s32.totalorder %s19, 4
      %s29 = sphi 0, %s31
      %s32 = sphi 0, %s29
      %s33 = sphi 0, %s32
      %s49 = sphi 0, %s33
      %s55 = sphi 0, %s57
      %s58 = sphi 0, %s55
      %s59 = sphi 0, %s58
      %s75 = sphi 0, %s59
      %s81 = sphi 0, %s83
      %s84 = sphi 0, %s81
      %s85 = sphi 0, %s84
      %s101 = sphi 0, %s85
    $region4: #{tpu_custom_call.1} parent=1 // loop_header_branch
      %22 = sbr.rel (%p20) target = $region8
    $region5: #{tpu_custom_call.1} parent=1 // loop_body
      %s24 = ssub.s32 %s19, 1
      %s25 = ssub.s32 %s19, 2
      %s26 = sadd.s32 %s19, 1
      %s27 = ssub.s32 %s19, %s26
      %p28 = scmp.eq.s32.totalorder %s27, 0
      %s30 = sadd.s32 %s29, 1
      %s31 = scalar_select %p28, %s29, %s30
      %p34 = pneg %p28
      %p35 = scmp.eq.s32.totalorder %s19, 1
      %p36 = por %p34, %p35
      %p37 = scmp.ne.s32.totalorder %s29, %s32
      %p38 = scmp.eq.s32.totalorder %s19, 0
      %p39 = por %p37, %p38
      %p40 = scmp.ne.s32.totalorder %s29, %s32
      %p41 = scmp.eq.s32.totalorder %s24, 1
      %p42 = por %p40, %p41
      %p43 = scmp.ne.s32.totalorder %s32, %s33
      %p44 = scmp.eq.s32.totalorder %s24, 0
      %p45 = por %p43, %p44
      %p46 = scmp.ne.s32.totalorder %s32, %s33
      %p47 = scmp.eq.s32.totalorder %s25, 1
      %p48 = por %p46, %p47
      %p50 = scmp.ne.s32.totalorder %s33, %s49
      %p51 = scmp.eq.s32.totalorder %s25, 0
      %p52 = por %p50, %p51
      %s53 = ssub.s32 %s19, %s26
      %p54 = scmp.eq.s32.totalorder %s53, 0
      %s56 = sadd.s32 %s55, 1
      %s57 = scalar_select %p54, %s55, %s56
      %p60 = pneg %p54
      %p61 = scmp.eq.s32.totalorder %s19, 1
      %p62 = por %p60, %p61
      %p63 = scmp.ne.s32.totalorder %s55, %s58
      %p64 = scmp.eq.s32.totalorder %s19, 0
      %p65 = por %p63, %p64
      %p66 = scmp.ne.s32.totalorder %s55, %s58
      %p67 = scmp.eq.s32.totalorder %s24, 1
      %p68 = por %p66, %p67
      %p69 = scmp.ne.s32.totalorder %s58, %s59
      %p70 = scmp.eq.s32.totalorder %s24, 0
      %p71 = por %p69, %p70
      %p72 = scmp.ne.s32.totalorder %s58, %s59
      %p73 = scmp.eq.s32.totalorder %s25, 1
      %p74 = por %p72, %p73
      %p76 = scmp.ne.s32.totalorder %s59, %s75
      %p77 = scmp.eq.s32.totalorder %s25, 0
      %p78 = por %p76, %p77
      %s79 = ssub.s32 %s19, %s26
      %p80 = scmp.eq.s32.totalorder %s79, 0
      %s82 = sadd.s32 %s81, 1
      %s83 = scalar_select %p80, %s81, %s82
      %p86 = pneg %p80
      %p87 = scmp.eq.s32.totalorder %s19, 1
      %p88 = por %p86, %p87
      %p89 = scmp.ne.s32.totalorder %s81, %s84
      %p90 = scmp.eq.s32.totalorder %s19, 0
      %p91 = por %p89, %p90
      %p92 = scmp.ne.s32.totalorder %s81, %s84
      %p93 = scmp.eq.s32.totalorder %s24, 1
      %p94 = por %p92, %p93
      %p95 = scmp.ne.s32.totalorder %s84, %s85
      %p96 = scmp.eq.s32.totalorder %s24, 0
      %p97 = por %p95, %p96
      %p98 = scmp.ne.s32.totalorder %s84, %s85
      %p99 = scmp.eq.s32.totalorder %s25, 1
      %p100 = por %p98, %p99
      %p102 = scmp.ne.s32.totalorder %s85, %s101
      %p103 = scmp.eq.s32.totalorder %s25, 0
      %p104 = por %p102, %p103
      %p105 = scmp.le.s32.totalorder 1, %s19
      %p106 = scmp.lt.s32.totalorder %s19, 3
      %p107 = pnand %p105, %p106
      %p108 = pneg %p107
      // Predicated region
      $region9: #{tpu_custom_call.1} parent=5 // pred_check
        _
      $region10: #{tpu_custom_call.1} parent=5 // pred_check_branch
        %110 = sbr.rel (%p107) target = $region12
      $region11: #{tpu_custom_call.1} parent=5 // pred_region
        %s111 = ssub.s32 %s19, 1
      $region12: #{tpu_custom_call.1} parent=5 // pred_fallthru
        _
      %p112 = scmp.lt.s32.totalorder %s19, 2
      // Predicated region
      $region13: #{tpu_custom_call.1} parent=5 // pred_check
        %p113 = pneg %p112
      $region14: #{tpu_custom_call.1} parent=5 // pred_check_branch
        %115 = sbr.rel (%p113) target = $region16
      $region15: #{tpu_custom_call.1} parent=5 // pred_region
        // Predicated region
        $region17: #{tpu_custom_call.1} parent=15 // pred_check
          %p116 = pneg %p39
        $region18: #{tpu_custom_call.1} parent=15 // pred_check_branch
          %118 = sbr.rel (%p116) target = $region20
        $region19: #{tpu_custom_call.1} parent=15 // pred_region
          %s119 = smul.u32 16, %s19
          %p120 = scmp.lt.s32.totalorder %s119, 31
          %s121 = scalar_select %p120, %s119, 31
          %s122 = smul.addr %s121, 8
          %s123 = scalar_lea.vmem %s2, %s122
          %s124 = smul.u32 16, %s19
        $region20: #{tpu_custom_call.1} parent=15 // pred_fallthru
          _
        // Predicated region
        $region21: #{tpu_custom_call.1} parent=15 // pred_check
          %p125 = pneg %p65
        $region22: #{tpu_custom_call.1} parent=15 // pred_check_branch
          %127 = sbr.rel (%p125) target = $region24
        $region23: #{tpu_custom_call.1} parent=15 // pred_region
          %s128 = smul.u32 16, %s19
          %p129 = scmp.lt.s32.totalorder %s128, 31
          %s130 = scalar_select %p129, %s128, 31
          %s131 = smul.addr %s130, 8
          %s132 = scalar_lea.vmem %s3, %s131
          %s133 = smul.u32 16, %s19
        $region24: #{tpu_custom_call.1} parent=15 // pred_fallthru
          _
      $region16: #{tpu_custom_call.1} parent=5 // pred_fallthru
        _
      %p134 = scmp.le.s32.totalorder 1, %s19
      %p135 = scmp.lt.s32.totalorder %s19, 3
      %p136 = pnand %p134, %p135
      %p137 = pneg %p136
      // Predicated region
      $region25: #{tpu_custom_call.1} parent=5 // pred_check
        _
      $region26: #{tpu_custom_call.1} parent=5 // pred_check_branch
        %139 = sbr.rel (%p136) target = $region28
      $region27: #{tpu_custom_call.1} parent=5 // pred_region
        %s140 = ssub.s32 %s19, 1
        %s141 = smul.u32 16, %s24
        %p142 = scmp.lt.s32.totalorder %s141, 31
        %s143 = scalar_select %p142, %s141, 31
        %s144 = smul.addr %s143, 8
        %s145 = scalar_lea.vmem %s2, %s144
        %p146 = pneg %p45
        %p147 = pneg %p42
        %s148 = smul.u32 16, %s24
        %p149 = scmp.lt.s32.totalorder %s148, 31
        %s150 = scalar_select %p149, %s148, 31
        %s151 = smul.addr %s150, 8
        %s152 = scalar_lea.vmem %s3, %s151
        %p153 = pneg %p71
        %p154 = pneg %p68
        %p155 = pneg %p97
        %p156 = pneg %p94
        %s157 = sand.u32 %s84, 1
        %s158 = scalar_lea.sflag [#allocation7], %s157
        %s159 = sand.u32 %s84, 1
        %s160 = smul.addr %s159, 128
        %s161 = scalar_lea.vmem [#allocation6], %s160
        %s162 = smul.u32 16, %s24
        %p163 = scmp.lt.s32.totalorder %s162, 31
        %s164 = scalar_select %p163, %s162, 31
        %s165 = smul.addr %s164, 8
        %s166 = scalar_lea.vmem %s2, %s165
        %s167 = smul.u32 16, %s24
        %s168 = smul.u32 16, %s24
        %p169 = scmp.lt.s32.totalorder %s168, 31
        %s170 = scalar_select %p169, %s168, 31
        %s171 = smul.addr %s170, 8
        %s172 = scalar_lea.vmem %s3, %s171
        %s173 = smul.u32 16, %s24
        %s174 = smul.u32 16, %s24
        %s175 = smul.u32 %s24, 128
        loop: start=0, step=1, limit=128
        $region29: #{tpu_custom_call.1} parent=27 // loop_pre_header
          _
        $region30: #{tpu_custom_call.1} parent=27 // loop_header
          %s177 = sphi 0, %s181
          %p178 = scmp.ge.s32.totalorder %s177, 128
        $region31: #{tpu_custom_call.1} parent=27 // loop_header_branch
          %180 = sbr.rel (%p178) target = $region35
        $region32: #{tpu_custom_call.1} parent=27 // loop_body
          %s182 = sadd.s32 %s175, %s177
          %s183 = smul.u32 %s182, 8
          %s184 = sld [smem:[#allocation5 + %s183]]
          %s185 = scalar_lea.vmem %s1, %s184
          %s186 = scalar_lea.vmem [#allocation2], %s177
          %p188 = scmp.lt.u32.totalorder 1, 8
          %p189 = pneg %p188
          // Predicated region
          $region36: #{tpu_custom_call.1} parent=32 // pred_check
            _
          $region37: #{tpu_custom_call.1} parent=32 // pred_check_branch
            %191 = sbr.rel (%p188) target = $region39
          $region38: #{tpu_custom_call.1} parent=32 // pred_region
            %s207 = sand.u32 1, 7
            %p208 = scmp.eq.s32.totalorder %s207, 0
            %p209 = pneg %p208
            // Predicated region
            $region51: #{tpu_custom_call.1} parent=38 // pred_check
              _
            $region52: #{tpu_custom_call.1} parent=38 // pred_check_branch
              %211 = sbr.rel (%p208) target = $region54
            $region53: #{tpu_custom_call.1} parent=38 // pred_region
              %s212 = sand.u32 1, 7
              %s213 = ssub.s32 1, %s212
              %s214 = scalar_lea.vmem %s185, %s213
              %s215 = ssub.s32 1, %s212
              %s216 = scalar_lea.vmem %s186, %s215 [#allocation2]
              %s217 = sshll.u32 1, %s212
              %s218 = ssub.s32 %s217, 1
              loop: start=0, step=1, limit=1
              $region55: #{tpu_custom_call.1} parent=53 // loop_pre_header
                _
              $region56: #{tpu_custom_call.1} parent=53 // loop_header
                %s220 = sphi 0, %s224
                %p221 = scmp.ge.s32.totalorder %s220, 1
                %s225 = sphi %s214, %s214
                %s226 = sphi %s216, %s216
              $region57: #{tpu_custom_call.1} parent=53 // loop_header_branch
                %223 = sbr.rel (%p221) target = $region61
              $region58: #{tpu_custom_call.1} parent=53 // loop_body
                %v227 = vld [vmem:[%s225] sm:%s218]
                %228 = vst [vmem:[%s226] sm:%s218] %v227
              $region59: #{tpu_custom_call.1} parent=53 // loop_footer
                %s224 = sadd.s32 1, %s220
              $region60: #{tpu_custom_call.1} parent=53 // loop_footer_branch
                %219 = sbr.rel target = $region56
              $region61: #{tpu_custom_call.1} parent=53 // loop_exit
                _
            $region54: #{tpu_custom_call.1} parent=38 // pred_fallthru
              _
          $region39: #{tpu_custom_call.1} parent=32 // pred_fallthru
            _
          // Predicated region
          $region40: #{tpu_custom_call.1} parent=32 // pred_check
            %p192 = pneg %p188
          $region41: #{tpu_custom_call.1} parent=32 // pred_check_branch
            %194 = sbr.rel (%p192) target = $region43
          $region42: #{tpu_custom_call.1} parent=32 // pred_region
            %s195 = sshll.u32 1, 1
            %s196 = ssub.s32 %s195, 1
            loop: start=0, step=1, limit=1
            $region44: #{tpu_custom_call.1} parent=42 // loop_pre_header
              _
            $region45: #{tpu_custom_call.1} parent=42 // loop_header
              %s198 = sphi 0, %s202
              %p199 = scmp.ge.s32.totalorder %s198, 1
              %s203 = sphi %s185, %s185
              %s204 = sphi %s186, %s186
            $region46: #{tpu_custom_call.1} parent=42 // loop_header_branch
              %201 = sbr.rel (%p199) target = $region50
            $region47: #{tpu_custom_call.1} parent=42 // loop_body
              %v205 = vld [vmem:[%s203] sm:%s196]
              %206 = vst [vmem:[%s204] sm:%s196] %v205
            $region48: #{tpu_custom_call.1} parent=42 // loop_footer
              %s202 = sadd.s32 1, %s198
            $region49: #{tpu_custom_call.1} parent=42 // loop_footer_branch
              %197 = sbr.rel target = $region45
            $region50: #{tpu_custom_call.1} parent=42 // loop_exit
              _
          $region43: #{tpu_custom_call.1} parent=32 // pred_fallthru
            _
          // Predicated region
          $region62: #{tpu_custom_call.1} parent=32 // pred_check
            _
          $region63: #{tpu_custom_call.1} parent=32 // pred_check_branch
            %231 = sbr.rel (0) target = $region65
          $region64: #{tpu_custom_call.1} parent=32 // pred_region
            %232 = vsyncadd [#allocation3], 16
          $region65: #{tpu_custom_call.1} parent=32 // pred_fallthru
            _
        $region33: #{tpu_custom_call.1} parent=27 // loop_footer
          %s181 = sadd.s32 1, %s177
        $region34: #{tpu_custom_call.1} parent=27 // loop_footer_branch
          %176 = sbr.rel target = $region30
        $region35: #{tpu_custom_call.1} parent=27 // loop_exit
          _
        loop: start=0, step=1, limit=128
        $region66: #{tpu_custom_call.1} parent=27 // loop_pre_header
          _
        $region67: #{tpu_custom_call.1} parent=27 // loop_header
          %s234 = sphi 0, %s238
          %p235 = scmp.ge.s32.totalorder %s234, 128
        $region68: #{tpu_custom_call.1} parent=27 // loop_header_branch
          %237 = sbr.rel (%p235) target = $region72
        $region69: #{tpu_custom_call.1} parent=27 // loop_body
          %s239 = sadd.s32 %s175, %s234
          %s240 = smul.u32 %s239, 8
          %s241 = sadd.s32 %s240, 1
          %s242 = sld [smem:[#allocation5 + %s241]]
          %s243 = sadd.s32 %s234, 128
          %s244 = scalar_lea.vmem %s1, %s242
          %s245 = scalar_lea.vmem [#allocation2], %s243
          %s246 = scalar_lea.sflag [#allocation3], 1
          %p248 = scmp.lt.u32.totalorder 1, 8
          %p249 = pneg %p248
          // Predicated region
          $region73: #{tpu_custom_call.1} parent=69 // pred_check
            _
          $region74: #{tpu_custom_call.1} parent=69 // pred_check_branch
            %251 = sbr.rel (%p248) target = $region76
          $region75: #{tpu_custom_call.1} parent=69 // pred_region
            %s267 = sand.u32 1, 7
            %p268 = scmp.eq.s32.totalorder %s267, 0
            %p269 = pneg %p268
            // Predicated region
            $region88: #{tpu_custom_call.1} parent=75 // pred_check
              _
            $region89: #{tpu_custom_call.1} parent=75 // pred_check_branch
              %271 = sbr.rel (%p268) target = $region91
            $region90: #{tpu_custom_call.1} parent=75 // pred_region
              %s272 = sand.u32 1, 7
              %s273 = ssub.s32 1, %s272
              %s274 = scalar_lea.vmem %s244, %s273
              %s275 = ssub.s32 1, %s272
              %s276 = scalar_lea.vmem %s245, %s275 [#allocation2]
              %s277 = sshll.u32 1, %s272
              %s278 = ssub.s32 %s277, 1
              loop: start=0, step=1, limit=1
              $region92: #{tpu_custom_call.1} parent=90 // loop_pre_header
                _
              $region93: #{tpu_custom_call.1} parent=90 // loop_header
                %s280 = sphi 0, %s284
                %p281 = scmp.ge.s32.totalorder %s280, 1
                %s285 = sphi %s274, %s274
                %s286 = sphi %s276, %s276
              $region94: #{tpu_custom_call.1} parent=90 // loop_header_branch
                %283 = sbr.rel (%p281) target = $region98
              $region95: #{tpu_custom_call.1} parent=90 // loop_body
                %v287 = vld [vmem:[%s285] sm:%s278]
                %288 = vst [vmem:[%s286] sm:%s278] %v287
              $region96: #{tpu_custom_call.1} parent=90 // loop_footer
                %s284 = sadd.s32 1, %s280
              $region97: #{tpu_custom_call.1} parent=90 // loop_footer_branch
                %279 = sbr.rel target = $region93
              $region98: #{tpu_custom_call.1} parent=90 // loop_exit
                _
            $region91: #{tpu_custom_call.1} parent=75 // pred_fallthru
              _
          $region76: #{tpu_custom_call.1} parent=69 // pred_fallthru
            _
          // Predicated region
          $region77: #{tpu_custom_call.1} parent=69 // pred_check
            %p252 = pneg %p248
          $region78: #{tpu_custom_call.1} parent=69 // pred_check_branch
            %254 = sbr.rel (%p252) target = $region80
          $region79: #{tpu_custom_call.1} parent=69 // pred_region
            %s255 = sshll.u32 1, 1
            %s256 = ssub.s32 %s255, 1
            loop: start=0, step=1, limit=1
            $region81: #{tpu_custom_call.1} parent=79 // loop_pre_header
              _
            $region82: #{tpu_custom_call.1} parent=79 // loop_header
              %s258 = sphi 0, %s262
              %p259 = scmp.ge.s32.totalorder %s258, 1
              %s263 = sphi %s244, %s244
              %s264 = sphi %s245, %s245
            $region83: #{tpu_custom_call.1} parent=79 // loop_header_branch
              %261 = sbr.rel (%p259) target = $region87
            $region84: #{tpu_custom_call.1} parent=79 // loop_body
              %v265 = vld [vmem:[%s263] sm:%s256]
              %266 = vst [vmem:[%s264] sm:%s256] %v265
            $region85: #{tpu_custom_call.1} parent=79 // loop_footer
              %s262 = sadd.s32 1, %s258
            $region86: #{tpu_custom_call.1} parent=79 // loop_footer_branch
              %257 = sbr.rel target = $region82
            $region87: #{tpu_custom_call.1} parent=79 // loop_exit
              _
          $region80: #{tpu_custom_call.1} parent=69 // pred_fallthru
            _
          // Predicated region
          $region99: #{tpu_custom_call.1} parent=69 // pred_check
            _
          $region100: #{tpu_custom_call.1} parent=69 // pred_check_branch
            %291 = sbr.rel (0) target = $region102
          $region101: #{tpu_custom_call.1} parent=69 // pred_region
            %292 = vsyncadd %s246, 16
          $region102: #{tpu_custom_call.1} parent=69 // pred_fallthru
            _
        $region70: #{tpu_custom_call.1} parent=27 // loop_footer
          %s238 = sadd.s32 1, %s234
        $region71: #{tpu_custom_call.1} parent=27 // loop_footer_branch
          %233 = sbr.rel target = $region67
        $region72: #{tpu_custom_call.1} parent=27 // loop_exit
          _
        %v293 = vld [vmem:[%s166] sm:$0xff]
        %v294 = vld [vmem:[%s166 + $0x8] sm:$0xff]
        %v295 = vld [vmem:[%s166 + $0x10] sm:$0xff]
        %v296 = vld [vmem:[%s166 + $0x18] sm:$0xff]
        %v297 = vld [vmem:[%s166 + $0x20] sm:$0xff]
        %v298 = vld [vmem:[%s166 + $0x28] sm:$0xff]
        %v299 = vld [vmem:[%s166 + $0x30] sm:$0xff]
        %v300 = vld [vmem:[%s166 + $0x38] sm:$0xff]
        %v301 = vld [vmem:[%s166 + $0x40] sm:$0xff]
        %v302 = vld [vmem:[%s166 + $0x48] sm:$0xff]
        %v303 = vld [vmem:[%s166 + $0x50] sm:$0xff]
        %v304 = vld [vmem:[%s166 + $0x58] sm:$0xff]
        %v305 = vld [vmem:[%s166 + $0x60] sm:$0xff]
        %v306 = vld [vmem:[%s166 + $0x68] sm:$0xff]
        %v307 = vld [vmem:[%s166 + $0x70] sm:$0xff]
        %v308 = vld [vmem:[%s166 + $0x78] sm:$0xff]
        %v309 = vld [vmem:[%s172] sm:$0xff]
        %v310 = vld [vmem:[%s172 + $0x8] sm:$0xff]
        %v311 = vld [vmem:[%s172 + $0x10] sm:$0xff]
        %v312 = vld [vmem:[%s172 + $0x18] sm:$0xff]
        %v313 = vld [vmem:[%s172 + $0x20] sm:$0xff]
        %v314 = vld [vmem:[%s172 + $0x28] sm:$0xff]
        %v315 = vld [vmem:[%s172 + $0x30] sm:$0xff]
        %v316 = vld [vmem:[%s172 + $0x38] sm:$0xff]
        %v317 = vld [vmem:[%s172 + $0x40] sm:$0xff]
        %v318 = vld [vmem:[%s172 + $0x48] sm:$0xff]
        %v319 = vld [vmem:[%s172 + $0x50] sm:$0xff]
        %v320 = vld [vmem:[%s172 + $0x58] sm:$0xff]
        %v321 = vld [vmem:[%s172 + $0x60] sm:$0xff]
        %v322 = vld [vmem:[%s172 + $0x68] sm:$0xff]
        %v323 = vld [vmem:[%s172 + $0x70] sm:$0xff]
        %v324 = vld [vmem:[%s172 + $0x78] sm:$0xff]
        %v325 = vcvt.s32.f32 %v309
        %v326 = vcvt.s32.f32 %v310
        %v327 = vcvt.s32.f32 %v311
        %v328 = vcvt.s32.f32 %v312
        %v329 = vcvt.s32.f32 %v313
        %v330 = vcvt.s32.f32 %v314
        %v331 = vcvt.s32.f32 %v315
        %v332 = vcvt.s32.f32 %v316
        %v333 = vcvt.s32.f32 %v317
        %v334 = vcvt.s32.f32 %v318
        %v335 = vcvt.s32.f32 %v319
        %v336 = vcvt.s32.f32 %v320
        %v337 = vcvt.s32.f32 %v321
        %v338 = vcvt.s32.f32 %v322
        %v339 = vcvt.s32.f32 %v323
        %v340 = vcvt.s32.f32 %v324
        %v341 = vlaneseq
        %v342 = vand.u32 %v341, 127
        %343 = vset.pattern.permute.xlu0 0
        %344 = vperm.xlu0 %343, %v309
        %v345 = vpop.permute.xlu0 %344
        %346 = vset.pattern.permute.xlu0 0
        %347 = vperm.xlu0 %346, %v310
        %v348 = vpop.permute.xlu0 %347
        %349 = vset.pattern.permute.xlu0 0
        %350 = vperm.xlu0 %349, %v311
        %v351 = vpop.permute.xlu0 %350
        %352 = vset.pattern.permute.xlu0 0
        %353 = vperm.xlu0 %352, %v312
        %v354 = vpop.permute.xlu0 %353
        %355 = vset.pattern.permute.xlu0 0
        %356 = vperm.xlu0 %355, %v313
        %v357 = vpop.permute.xlu0 %356
        %358 = vset.pattern.permute.xlu0 0
        %359 = vperm.xlu0 %358, %v314
        %v360 = vpop.permute.xlu0 %359
        %361 = vset.pattern.permute.xlu0 0
        %362 = vperm.xlu0 %361, %v315
        %v363 = vpop.permute.xlu0 %362
        %364 = vset.pattern.permute.xlu0 0
        %365 = vperm.xlu0 %364, %v316
        %v366 = vpop.permute.xlu0 %365
        %367 = vset.pattern.permute.xlu0 0
        %368 = vperm.xlu0 %367, %v317
        %v369 = vpop.permute.xlu0 %368
        %370 = vset.pattern.permute.xlu0 0
        %371 = vperm.xlu0 %370, %v318
        %v372 = vpop.permute.xlu0 %371
        %373 = vset.pattern.permute.xlu0 0
        %374 = vperm.xlu0 %373, %v319
        %v375 = vpop.permute.xlu0 %374
        %376 = vset.pattern.permute.xlu0 0
        %377 = vperm.xlu0 %376, %v320
        %v378 = vpop.permute.xlu0 %377
        %379 = vset.pattern.permute.xlu0 0
        %380 = vperm.xlu0 %379, %v321
        %v381 = vpop.permute.xlu0 %380
        %382 = vset.pattern.permute.xlu0 0
        %383 = vperm.xlu0 %382, %v322
        %v384 = vpop.permute.xlu0 %383
        %385 = vset.pattern.permute.xlu0 0
        %386 = vperm.xlu0 %385, %v323
        %v387 = vpop.permute.xlu0 %386
        %388 = vset.pattern.permute.xlu0 0
        %389 = vperm.xlu0 %388, %v324
        %v390 = vpop.permute.xlu0 %389
        %vm391 = vcmp.lt.s32.totalorder %v342, %v345
        %vm392 = vcmp.lt.s32.totalorder %v342, %v348
        %vm393 = vcmp.lt.s32.totalorder %v342, %v351
        %vm394 = vcmp.lt.s32.totalorder %v342, %v354
        %vm395 = vcmp.lt.s32.totalorder %v342, %v357
        %vm396 = vcmp.lt.s32.totalorder %v342, %v360
        %vm397 = vcmp.lt.s32.totalorder %v342, %v363
        %vm398 = vcmp.lt.s32.totalorder %v342, %v366
        %vm399 = vcmp.lt.s32.totalorder %v342, %v369
        %vm400 = vcmp.lt.s32.totalorder %v342, %v372
        %vm401 = vcmp.lt.s32.totalorder %v342, %v375
        %vm402 = vcmp.lt.s32.totalorder %v342, %v378
        %vm403 = vcmp.lt.s32.totalorder %v342, %v381
        %vm404 = vcmp.lt.s32.totalorder %v342, %v384
        %vm405 = vcmp.lt.s32.totalorder %v342, %v387
        %vm406 = vcmp.lt.s32.totalorder %v342, %v390
        %v407 = vsel %vm391, 1, 0
        %v408 = vsel %vm392, 1, 0
        %v409 = vsel %vm393, 1, 0
        %v410 = vsel %vm394, 1, 0
        %v411 = vsel %vm395, 1, 0
        %v412 = vsel %vm396, 1, 0
        %v413 = vsel %vm397, 1, 0
        %v414 = vsel %vm398, 1, 0
        %v415 = vsel %vm399, 1, 0
        %v416 = vsel %vm400, 1, 0
        %v417 = vsel %vm401, 1, 0
        %v418 = vsel %vm402, 1, 0
        %v419 = vsel %vm403, 1, 0
        %v420 = vsel %vm404, 1, 0
        %v421 = vsel %vm405, 1, 0
        %v422 = vsel %vm406, 1, 0
        %v423 = vcvt.s32.f32 %v407
        %v424 = vcvt.s32.f32 %v408
        %v425 = vcvt.s32.f32 %v409
        %v426 = vcvt.s32.f32 %v410
        %v427 = vcvt.s32.f32 %v411
        %v428 = vcvt.s32.f32 %v412
        %v429 = vcvt.s32.f32 %v413
        %v430 = vcvt.s32.f32 %v414
        %v431 = vcvt.s32.f32 %v415
        %v432 = vcvt.s32.f32 %v416
        %v433 = vcvt.s32.f32 %v417
        %v434 = vcvt.s32.f32 %v418
        %v435 = vcvt.s32.f32 %v419
        %v436 = vcvt.s32.f32 %v420
        %v437 = vcvt.s32.f32 %v421
        %v438 = vcvt.s32.f32 %v422
        %vm439 = vcmask 64512
        %v440 = vsel %vm439, %v293, 0.0
        %441 = vadd.xlane.f32.xlu0 %v440
        %v442 = vpop.xlane.xlu0 %441
        %v443 = vsel %vm439, %v294, 0.0
        %444 = vadd.xlane.f32.xlu0 %v443
        %v445 = vpop.xlane.xlu0 %444
        %v446 = vsel %vm439, %v295, 0.0
        %447 = vadd.xlane.f32.xlu0 %v446
        %v448 = vpop.xlane.xlu0 %447
        %v449 = vsel %vm439, %v296, 0.0
        %450 = vadd.xlane.f32.xlu0 %v449
        %v451 = vpop.xlane.xlu0 %450
        %v452 = vsel %vm439, %v297, 0.0
        %453 = vadd.xlane.f32.xlu0 %v452
        %v454 = vpop.xlane.xlu0 %453
        %v455 = vsel %vm439, %v298, 0.0
        %456 = vadd.xlane.f32.xlu0 %v455
        %v457 = vpop.xlane.xlu0 %456
        %v458 = vsel %vm439, %v299, 0.0
        %459 = vadd.xlane.f32.xlu0 %v458
        %v460 = vpop.xlane.xlu0 %459
        %v461 = vsel %vm439, %v300, 0.0
        %462 = vadd.xlane.f32.xlu0 %v461
        %v463 = vpop.xlane.xlu0 %462
        %v464 = vsel %vm439, %v301, 0.0
        %465 = vadd.xlane.f32.xlu0 %v464
        %v466 = vpop.xlane.xlu0 %465
        %v467 = vsel %vm439, %v302, 0.0
        %468 = vadd.xlane.f32.xlu0 %v467
        %v469 = vpop.xlane.xlu0 %468
        %v470 = vsel %vm439, %v303, 0.0
        %471 = vadd.xlane.f32.xlu0 %v470
        %v472 = vpop.xlane.xlu0 %471
        %v473 = vsel %vm439, %v304, 0.0
        %474 = vadd.xlane.f32.xlu0 %v473
        %v475 = vpop.xlane.xlu0 %474
        %v476 = vsel %vm439, %v305, 0.0
        %477 = vadd.xlane.f32.xlu0 %v476
        %v478 = vpop.xlane.xlu0 %477
        %v479 = vsel %vm439, %v306, 0.0
        %480 = vadd.xlane.f32.xlu0 %v479
        %v481 = vpop.xlane.xlu0 %480
        %v482 = vsel %vm439, %v307, 0.0
        %483 = vadd.xlane.f32.xlu0 %v482
        %v484 = vpop.xlane.xlu0 %483
        %v485 = vsel %vm439, %v308, 0.0
        %486 = vadd.xlane.f32.xlu0 %v485
        %v487 = vpop.xlane.xlu0 %486
        %vm488 = vcmp.ne.f32.partialorder %v442, 0.0
        %vm489 = vcmp.ne.f32.partialorder %v445, 0.0
        %vm490 = vcmp.ne.f32.partialorder %v448, 0.0
        %vm491 = vcmp.ne.f32.partialorder %v451, 0.0
        %vm492 = vcmp.ne.f32.partialorder %v454, 0.0
        %vm493 = vcmp.ne.f32.partialorder %v457, 0.0
        %vm494 = vcmp.ne.f32.partialorder %v460, 0.0
        %vm495 = vcmp.ne.f32.partialorder %v463, 0.0
        %vm496 = vcmp.ne.f32.partialorder %v466, 0.0
        %vm497 = vcmp.ne.f32.partialorder %v469, 0.0
        %vm498 = vcmp.ne.f32.partialorder %v472, 0.0
        %vm499 = vcmp.ne.f32.partialorder %v475, 0.0
        %vm500 = vcmp.ne.f32.partialorder %v478, 0.0
        %vm501 = vcmp.ne.f32.partialorder %v481, 0.0
        %vm502 = vcmp.ne.f32.partialorder %v484, 0.0
        %vm503 = vcmp.ne.f32.partialorder %v487, 0.0
        %v504 = vsel %vm488, %v442, 1.0
        %v505 = vsel %vm489, %v445, 1.0
        %v506 = vsel %vm490, %v448, 1.0
        %v507 = vsel %vm491, %v451, 1.0
        %v508 = vsel %vm492, %v454, 1.0
        %v509 = vsel %vm493, %v457, 1.0
        %v510 = vsel %vm494, %v460, 1.0
        %v511 = vsel %vm495, %v463, 1.0
        %v512 = vsel %vm496, %v466, 1.0
        %v513 = vsel %vm497, %v469, 1.0
        %v514 = vsel %vm498, %v472, 1.0
        %v515 = vsel %vm499, %v475, 1.0
        %v516 = vsel %vm500, %v478, 1.0
        %v517 = vsel %vm501, %v481, 1.0
        %v518 = vsel %vm502, %v484, 1.0
        %v519 = vsel %vm503, %v487, 1.0
        %v520 = vrcp.pop %v504
        %v521 = vmul.f32 %v293, %v520
        %v522 = vrcp.pop %v505
        %v523 = vmul.f32 %v294, %v522
        %v524 = vrcp.pop %v506
        %v525 = vmul.f32 %v295, %v524
        %v526 = vrcp.pop %v507
        %v527 = vmul.f32 %v296, %v526
        %v528 = vrcp.pop %v508
        %v529 = vmul.f32 %v297, %v528
        %v530 = vrcp.pop %v509
        %v531 = vmul.f32 %v298, %v530
        %v532 = vrcp.pop %v510
        %v533 = vmul.f32 %v299, %v532
        %v534 = vrcp.pop %v511
        %v535 = vmul.f32 %v300, %v534
        %v536 = vrcp.pop %v512
        %v537 = vmul.f32 %v301, %v536
        %v538 = vrcp.pop %v513
        %v539 = vmul.f32 %v302, %v538
        %v540 = vrcp.pop %v514
        %v541 = vmul.f32 %v303, %v540
        %v542 = vrcp.pop %v515
        %v543 = vmul.f32 %v304, %v542
        %v544 = vrcp.pop %v516
        %v545 = vmul.f32 %v305, %v544
        %v546 = vrcp.pop %v517
        %v547 = vmul.f32 %v306, %v546
        %v548 = vrcp.pop %v518
        %v549 = vmul.f32 %v307, %v548
        %v550 = vrcp.pop %v519
        %v551 = vmul.f32 %v308, %v550
        %v552 = vmax.f32 %v325, 1.0
        %v553 = vmax.f32 %v326, 1.0
        %v554 = vmax.f32 %v327, 1.0
        %v555 = vmax.f32 %v328, 1.0
        %v556 = vmax.f32 %v329, 1.0
        %v557 = vmax.f32 %v330, 1.0
        %v558 = vmax.f32 %v331, 1.0
        %v559 = vmax.f32 %v332, 1.0
        %v560 = vmax.f32 %v333, 1.0
        %v561 = vmax.f32 %v334, 1.0
        %v562 = vmax.f32 %v335, 1.0
        %v563 = vmax.f32 %v336, 1.0
        %v564 = vmax.f32 %v337, 1.0
        %v565 = vmax.f32 %v338, 1.0
        %v566 = vmax.f32 %v339, 1.0
        %v567 = vmax.f32 %v340, 1.0
        %569 = vset.pattern.permute.xlu0 0
        %570 = vperm.xlu0 %569, %v552
        %v571 = vpop.permute.xlu0 %570
        %574 = vset.pattern.permute.xlu0 0
        %575 = vperm.xlu0 %574, %v553
        %v576 = vpop.permute.xlu0 %575
        %579 = vset.pattern.permute.xlu0 0
        %580 = vperm.xlu0 %579, %v554
        %v581 = vpop.permute.xlu0 %580
        %584 = vset.pattern.permute.xlu0 0
        %585 = vperm.xlu0 %584, %v555
        %v586 = vpop.permute.xlu0 %585
        %589 = vset.pattern.permute.xlu0 0
        %590 = vperm.xlu0 %589, %v556
        %v591 = vpop.permute.xlu0 %590
        %594 = vset.pattern.permute.xlu0 0
        %595 = vperm.xlu0 %594, %v557
        %v596 = vpop.permute.xlu0 %595
        %599 = vset.pattern.permute.xlu0 0
        %600 = vperm.xlu0 %599, %v558
        %v601 = vpop.permute.xlu0 %600
        %604 = vset.pattern.permute.xlu0 0
        %605 = vperm.xlu0 %604, %v559
        %v606 = vpop.permute.xlu0 %605
        %609 = vset.pattern.permute.xlu0 0
        %610 = vperm.xlu0 %609, %v560
        %v611 = vpop.permute.xlu0 %610
        %614 = vset.pattern.permute.xlu0 0
        %615 = vperm.xlu0 %614, %v561
        %v616 = vpop.permute.xlu0 %615
        %619 = vset.pattern.permute.xlu0 0
        %620 = vperm.xlu0 %619, %v562
        %v621 = vpop.permute.xlu0 %620
        %624 = vset.pattern.permute.xlu0 0
        %625 = vperm.xlu0 %624, %v563
        %v626 = vpop.permute.xlu0 %625
        %629 = vset.pattern.permute.xlu0 0
        %630 = vperm.xlu0 %629, %v564
        %v631 = vpop.permute.xlu0 %630
        %634 = vset.pattern.permute.xlu0 0
        %635 = vperm.xlu0 %634, %v565
        %v636 = vpop.permute.xlu0 %635
        %639 = vset.pattern.permute.xlu0 0
        %640 = vperm.xlu0 %639, %v566
        %v641 = vpop.permute.xlu0 %640
        %644 = vset.pattern.permute.xlu0 0
        %645 = vperm.xlu0 %644, %v567
        %v646 = vpop.permute.xlu0 %645
        %v648 = vrcp.pop %v571
        %v649 = vmul.f32 %v423, %v648
        %v650 = vrcp.pop %v576
        %v651 = vmul.f32 %v424, %v650
        %v652 = vrcp.pop %v581
        %v653 = vmul.f32 %v425, %v652
        %v654 = vrcp.pop %v586
        %v655 = vmul.f32 %v426, %v654
        %v656 = vrcp.pop %v591
        %v657 = vmul.f32 %v427, %v656
        %v658 = vrcp.pop %v596
        %v659 = vmul.f32 %v428, %v658
        %v660 = vrcp.pop %v601
        %v661 = vmul.f32 %v429, %v660
        %v662 = vrcp.pop %v606
        %v663 = vmul.f32 %v430, %v662
        %v664 = vrcp.pop %v611
        %v665 = vmul.f32 %v431, %v664
        %v666 = vrcp.pop %v616
        %v667 = vmul.f32 %v432, %v666
        %v668 = vrcp.pop %v621
        %v669 = vmul.f32 %v433, %v668
        %v670 = vrcp.pop %v626
        %v671 = vmul.f32 %v434, %v670
        %v672 = vrcp.pop %v631
        %v673 = vmul.f32 %v435, %v672
        %v674 = vrcp.pop %v636
        %v675 = vmul.f32 %v436, %v674
        %v676 = vrcp.pop %v641
        %v677 = vmul.f32 %v437, %v676
        %v678 = vrcp.pop %v646
        %v679 = vmul.f32 %v438, %v678
        %v680 = vsel %vm488, 1, 0
        %v681 = vsel %vm489, 1, 0
        %v682 = vsel %vm490, 1, 0
        %v683 = vsel %vm491, 1, 0
        %v684 = vsel %vm492, 1, 0
        %v685 = vsel %vm493, 1, 0
        %v686 = vsel %vm494, 1, 0
        %v687 = vsel %vm495, 1, 0
        %v688 = vsel %vm496, 1, 0
        %v689 = vsel %vm497, 1, 0
        %v690 = vsel %vm498, 1, 0
        %v691 = vsel %vm499, 1, 0
        %v692 = vsel %vm500, 1, 0
        %v693 = vsel %vm501, 1, 0
        %v694 = vsel %vm502, 1, 0
        %v695 = vsel %vm503, 1, 0
        %vm696 = vcmp.eq.s32.totalorder %v680, 1
        %vm697 = vcmp.eq.s32.totalorder %v681, 1
        %vm698 = vcmp.eq.s32.totalorder %v682, 1
        %vm699 = vcmp.eq.s32.totalorder %v683, 1
        %vm700 = vcmp.eq.s32.totalorder %v684, 1
        %vm701 = vcmp.eq.s32.totalorder %v685, 1
        %vm702 = vcmp.eq.s32.totalorder %v686, 1
        %vm703 = vcmp.eq.s32.totalorder %v687, 1
        %vm704 = vcmp.eq.s32.totalorder %v688, 1
        %vm705 = vcmp.eq.s32.totalorder %v689, 1
        %vm706 = vcmp.eq.s32.totalorder %v690, 1
        %vm707 = vcmp.eq.s32.totalorder %v691, 1
        %vm708 = vcmp.eq.s32.totalorder %v692, 1
        %vm709 = vcmp.eq.s32.totalorder %v693, 1
        %vm710 = vcmp.eq.s32.totalorder %v694, 1
        %vm711 = vcmp.eq.s32.totalorder %v695, 1
        %v712 = vsel %vm696, %v521, %v649
        %v713 = vsel %vm697, %v523, %v651
        %v714 = vsel %vm698, %v525, %v653
        %v715 = vsel %vm699, %v527, %v655
        %v716 = vsel %vm700, %v529, %v657
        %v717 = vsel %vm701, %v531, %v659
        %v718 = vsel %vm702, %v533, %v661
        %v719 = vsel %vm703, %v535, %v663
        %v720 = vsel %vm704, %v537, %v665
        %v721 = vsel %vm705, %v539, %v667
        %v722 = vsel %vm706, %v541, %v669
        %v723 = vsel %vm707, %v543, %v671
        %v724 = vsel %vm708, %v545, %v673
        %v725 = vsel %vm709, %v547, %v675
        %v726 = vsel %vm710, %v549, %v677
        %v727 = vsel %vm711, %v551, %v679
        loop: start=0, step=1, limit=128
        $region103: #{tpu_custom_call.1} parent=27 // loop_pre_header
          _
        $region104: #{tpu_custom_call.1} parent=27 // loop_header
          %s729 = sphi 0, %s733
          %p730 = scmp.ge.s32.totalorder %s729, 128
        $region105: #{tpu_custom_call.1} parent=27 // loop_header_branch
          %732 = sbr.rel (%p730) target = $region109
        $region106: #{tpu_custom_call.1} parent=27 // loop_body
          %s734 = sadd.s32 %s175, %s729
          %s735 = smul.u32 %s734, 8
          %s736 = sadd.s32 %s735, 2
          %s737 = sld [smem:[#allocation5 + %s736]]
          %s738 = sadd.s32 %s729, 256
          %s739 = scalar_lea.vmem %s1, %s737
          %s740 = scalar_lea.vmem [#allocation2], %s738
          %s741 = scalar_lea.sflag [#allocation3], 2
          %p743 = scmp.lt.u32.totalorder 1, 8
          %p744 = pneg %p743
          // Predicated region
          $region110: #{tpu_custom_call.1} parent=106 // pred_check
            _
          $region111: #{tpu_custom_call.1} parent=106 // pred_check_branch
            %746 = sbr.rel (%p743) target = $region113
          $region112: #{tpu_custom_call.1} parent=106 // pred_region
            %s762 = sand.u32 1, 7
            %p763 = scmp.eq.s32.totalorder %s762, 0
            %p764 = pneg %p763
            // Predicated region
            $region125: #{tpu_custom_call.1} parent=112 // pred_check
              _
            $region126: #{tpu_custom_call.1} parent=112 // pred_check_branch
              %766 = sbr.rel (%p763) target = $region128
            $region127: #{tpu_custom_call.1} parent=112 // pred_region
              %s767 = sand.u32 1, 7
              %s768 = ssub.s32 1, %s767
              %s769 = scalar_lea.vmem %s739, %s768
              %s770 = ssub.s32 1, %s767
              %s771 = scalar_lea.vmem %s740, %s770 [#allocation2]
              %s772 = sshll.u32 1, %s767
              %s773 = ssub.s32 %s772, 1
              loop: start=0, step=1, limit=1
              $region129: #{tpu_custom_call.1} parent=127 // loop_pre_header
                _
              $region130: #{tpu_custom_call.1} parent=127 // loop_header
                %s775 = sphi 0, %s779
                %p776 = scmp.ge.s32.totalorder %s775, 1
                %s780 = sphi %s769, %s769
                %s781 = sphi %s771, %s771
              $region131: #{tpu_custom_call.1} parent=127 // loop_header_branch
                %778 = sbr.rel (%p776) target = $region135
              $region132: #{tpu_custom_call.1} parent=127 // loop_body
                %v782 = vld [vmem:[%s780] sm:%s773]
                %783 = vst [vmem:[%s781] sm:%s773] %v782
              $region133: #{tpu_custom_call.1} parent=127 // loop_footer
                %s779 = sadd.s32 1, %s775
              $region134: #{tpu_custom_call.1} parent=127 // loop_footer_branch
                %774 = sbr.rel target = $region130
              $region135: #{tpu_custom_call.1} parent=127 // loop_exit
                _
            $region128: #{tpu_custom_call.1} parent=112 // pred_fallthru
              _
          $region113: #{tpu_custom_call.1} parent=106 // pred_fallthru
            _
          // Predicated region
          $region114: #{tpu_custom_call.1} parent=106 // pred_check
            %p747 = pneg %p743
          $region115: #{tpu_custom_call.1} parent=106 // pred_check_branch
            %749 = sbr.rel (%p747) target = $region117
          $region116: #{tpu_custom_call.1} parent=106 // pred_region
            %s750 = sshll.u32 1, 1
            %s751 = ssub.s32 %s750, 1
            loop: start=0, step=1, limit=1
            $region118: #{tpu_custom_call.1} parent=116 // loop_pre_header
              _
            $region119: #{tpu_custom_call.1} parent=116 // loop_header
              %s753 = sphi 0, %s757
              %p754 = scmp.ge.s32.totalorder %s753, 1
              %s758 = sphi %s739, %s739
              %s759 = sphi %s740, %s740
            $region120: #{tpu_custom_call.1} parent=116 // loop_header_branch
              %756 = sbr.rel (%p754) target = $region124
            $region121: #{tpu_custom_call.1} parent=116 // loop_body
              %v760 = vld [vmem:[%s758] sm:%s751]
              %761 = vst [vmem:[%s759] sm:%s751] %v760
            $region122: #{tpu_custom_call.1} parent=116 // loop_footer
              %s757 = sadd.s32 1, %s753
            $region123: #{tpu_custom_call.1} parent=116 // loop_footer_branch
              %752 = sbr.rel target = $region119
            $region124: #{tpu_custom_call.1} parent=116 // loop_exit
              _
          $region117: #{tpu_custom_call.1} parent=106 // pred_fallthru
            _
          // Predicated region
          $region136: #{tpu_custom_call.1} parent=106 // pred_check
            _
          $region137: #{tpu_custom_call.1} parent=106 // pred_check_branch
            %786 = sbr.rel (0) target = $region139
          $region138: #{tpu_custom_call.1} parent=106 // pred_region
            %787 = vsyncadd %s741, 16
          $region139: #{tpu_custom_call.1} parent=106 // pred_fallthru
            _
        $region107: #{tpu_custom_call.1} parent=27 // loop_footer
          %s733 = sadd.s32 1, %s729
        $region108: #{tpu_custom_call.1} parent=27 // loop_footer_branch
          %728 = sbr.rel target = $region104
        $region109: #{tpu_custom_call.1} parent=27 // loop_exit
          _
        %s788 = smul.u32 128, 1
        %s789 = sshll.u32 %s788, 4
        %790 = dma.done [#allocation3], %s789
        %v791 = vld [vmem:[#allocation2] sm:$0xff]
        %v792 = vld [vmem:[#allocation2 + $0x8] sm:$0xff]
        %v793 = vld [vmem:[#allocation2 + $0x10] sm:$0xff]
        %v794 = vld [vmem:[#allocation2 + $0x18] sm:$0xff]
        %v795 = vld [vmem:[#allocation2 + $0x20] sm:$0xff]
        %v796 = vld [vmem:[#allocation2 + $0x28] sm:$0xff]
        %v797 = vld [vmem:[#allocation2 + $0x30] sm:$0xff]
        %v798 = vld [vmem:[#allocation2 + $0x38] sm:$0xff]
        %v799 = vld [vmem:[#allocation2 + $0x40] sm:$0xff]
        %v800 = vld [vmem:[#allocation2 + $0x48] sm:$0xff]
        %v801 = vld [vmem:[#allocation2 + $0x50] sm:$0xff]
        %v802 = vld [vmem:[#allocation2 + $0x58] sm:$0xff]
        %v803 = vld [vmem:[#allocation2 + $0x60] sm:$0xff]
        %v804 = vld [vmem:[#allocation2 + $0x68] sm:$0xff]
        %v805 = vld [vmem:[#allocation2 + $0x70] sm:$0xff]
        %v806 = vld [vmem:[#allocation2 + $0x78] sm:$0xff]
        %808 = vset.pattern.permute.xlu0 0
        %809 = vperm.xlu0 %808, %v712
        %v810 = vpop.permute.xlu0 %809
        %813 = vset.pattern.permute.xlu0 0
        %814 = vperm.xlu0 %813, %v713
        %v815 = vpop.permute.xlu0 %814
        %818 = vset.pattern.permute.xlu0 0
        %819 = vperm.xlu0 %818, %v714
        %v820 = vpop.permute.xlu0 %819
        %823 = vset.pattern.permute.xlu0 0
        %824 = vperm.xlu0 %823, %v715
        %v825 = vpop.permute.xlu0 %824
        %828 = vset.pattern.permute.xlu0 0
        %829 = vperm.xlu0 %828, %v716
        %v830 = vpop.permute.xlu0 %829
        %833 = vset.pattern.permute.xlu0 0
        %834 = vperm.xlu0 %833, %v717
        %v835 = vpop.permute.xlu0 %834
        %838 = vset.pattern.permute.xlu0 0
        %839 = vperm.xlu0 %838, %v718
        %v840 = vpop.permute.xlu0 %839
        %843 = vset.pattern.permute.xlu0 0
        %844 = vperm.xlu0 %843, %v719
        %v845 = vpop.permute.xlu0 %844
        %848 = vset.pattern.permute.xlu0 0
        %849 = vperm.xlu0 %848, %v720
        %v850 = vpop.permute.xlu0 %849
        %853 = vset.pattern.permute.xlu0 0
        %854 = vperm.xlu0 %853, %v721
        %v855 = vpop.permute.xlu0 %854
        %858 = vset.pattern.permute.xlu0 0
        %859 = vperm.xlu0 %858, %v722
        %v860 = vpop.permute.xlu0 %859
        %863 = vset.pattern.permute.xlu0 0
        %864 = vperm.xlu0 %863, %v723
        %v865 = vpop.permute.xlu0 %864
        %868 = vset.pattern.permute.xlu0 0
        %869 = vperm.xlu0 %868, %v724
        %v870 = vpop.permute.xlu0 %869
        %873 = vset.pattern.permute.xlu0 0
        %874 = vperm.xlu0 %873, %v725
        %v875 = vpop.permute.xlu0 %874
        %878 = vset.pattern.permute.xlu0 0
        %879 = vperm.xlu0 %878, %v726
        %v880 = vpop.permute.xlu0 %879
        %883 = vset.pattern.permute.xlu0 0
        %884 = vperm.xlu0 %883, %v727
        %v885 = vpop.permute.xlu0 %884
        %v887 = vmul.f32 %v810, %v791
        %v888 = vmul.f32 %v815, %v792
        %v889 = vmul.f32 %v820, %v793
        %v890 = vmul.f32 %v825, %v794
        %v891 = vmul.f32 %v830, %v795
        %v892 = vmul.f32 %v835, %v796
        %v893 = vmul.f32 %v840, %v797
        %v894 = vmul.f32 %v845, %v798
        %v895 = vmul.f32 %v850, %v799
        %v896 = vmul.f32 %v855, %v800
        %v897 = vmul.f32 %v860, %v801
        %v898 = vmul.f32 %v865, %v802
        %v899 = vmul.f32 %v870, %v803
        %v900 = vmul.f32 %v875, %v804
        %v901 = vmul.f32 %v880, %v805
        %v902 = vmul.f32 %v885, %v806
        %v903 = vadd.f32 %v887, 0.0
        %v904 = vadd.f32 %v888, 0.0
        %v905 = vadd.f32 %v889, 0.0
        %v906 = vadd.f32 %v890, 0.0
        %v907 = vadd.f32 %v891, 0.0
        %v908 = vadd.f32 %v892, 0.0
        %v909 = vadd.f32 %v893, 0.0
        %v910 = vadd.f32 %v894, 0.0
        %v911 = vadd.f32 %v895, 0.0
        %v912 = vadd.f32 %v896, 0.0
        %v913 = vadd.f32 %v897, 0.0
        %v914 = vadd.f32 %v898, 0.0
        %v915 = vadd.f32 %v899, 0.0
        %v916 = vadd.f32 %v900, 0.0
        %v917 = vadd.f32 %v901, 0.0
        %v918 = vadd.f32 %v902, 0.0
        loop: start=0, step=1, limit=128
        $region140: #{tpu_custom_call.1} parent=27 // loop_pre_header
          _
        $region141: #{tpu_custom_call.1} parent=27 // loop_header
          %s920 = sphi 0, %s924
          %p921 = scmp.ge.s32.totalorder %s920, 128
        $region142: #{tpu_custom_call.1} parent=27 // loop_header_branch
          %923 = sbr.rel (%p921) target = $region146
        $region143: #{tpu_custom_call.1} parent=27 // loop_body
          %s925 = sadd.s32 %s175, %s920
          %s926 = smul.u32 %s925, 8
          %s927 = sadd.s32 %s926, 3
          %s928 = sld [smem:[#allocation5 + %s927]]
          %s929 = sadd.s32 %s920, 384
          %s930 = scalar_lea.vmem %s1, %s928
          %s931 = scalar_lea.vmem [#allocation2], %s929
          %s932 = scalar_lea.sflag [#allocation3], 3
          %p934 = scmp.lt.u32.totalorder 1, 8
          %p935 = pneg %p934
          // Predicated region
          $region147: #{tpu_custom_call.1} parent=143 // pred_check
            _
          $region148: #{tpu_custom_call.1} parent=143 // pred_check_branch
            %937 = sbr.rel (%p934) target = $region150
          $region149: #{tpu_custom_call.1} parent=143 // pred_region
            %s953 = sand.u32 1, 7
            %p954 = scmp.eq.s32.totalorder %s953, 0
            %p955 = pneg %p954
            // Predicated region
            $region162: #{tpu_custom_call.1} parent=149 // pred_check
              _
            $region163: #{tpu_custom_call.1} parent=149 // pred_check_branch
              %957 = sbr.rel (%p954) target = $region165
            $region164: #{tpu_custom_call.1} parent=149 // pred_region
              %s958 = sand.u32 1, 7
              %s959 = ssub.s32 1, %s958
              %s960 = scalar_lea.vmem %s930, %s959
              %s961 = ssub.s32 1, %s958
              %s962 = scalar_lea.vmem %s931, %s961 [#allocation2]
              %s963 = sshll.u32 1, %s958
              %s964 = ssub.s32 %s963, 1
              loop: start=0, step=1, limit=1
              $region166: #{tpu_custom_call.1} parent=164 // loop_pre_header
                _
              $region167: #{tpu_custom_call.1} parent=164 // loop_header
                %s966 = sphi 0, %s970
                %p967 = scmp.ge.s32.totalorder %s966, 1
                %s971 = sphi %s960, %s960
                %s972 = sphi %s962, %s962
              $region168: #{tpu_custom_call.1} parent=164 // loop_header_branch
                %969 = sbr.rel (%p967) target = $region172
              $region169: #{tpu_custom_call.1} parent=164 // loop_body
                %v973 = vld [vmem:[%s971] sm:%s964]
                %974 = vst [vmem:[%s972] sm:%s964] %v973
              $region170: #{tpu_custom_call.1} parent=164 // loop_footer
                %s970 = sadd.s32 1, %s966
              $region171: #{tpu_custom_call.1} parent=164 // loop_footer_branch
                %965 = sbr.rel target = $region167
              $region172: #{tpu_custom_call.1} parent=164 // loop_exit
                _
            $region165: #{tpu_custom_call.1} parent=149 // pred_fallthru
              _
          $region150: #{tpu_custom_call.1} parent=143 // pred_fallthru
            _
          // Predicated region
          $region151: #{tpu_custom_call.1} parent=143 // pred_check
            %p938 = pneg %p934
          $region152: #{tpu_custom_call.1} parent=143 // pred_check_branch
            %940 = sbr.rel (%p938) target = $region154
          $region153: #{tpu_custom_call.1} parent=143 // pred_region
            %s941 = sshll.u32 1, 1
            %s942 = ssub.s32 %s941, 1
            loop: start=0, step=1, limit=1
            $region155: #{tpu_custom_call.1} parent=153 // loop_pre_header
              _
            $region156: #{tpu_custom_call.1} parent=153 // loop_header
              %s944 = sphi 0, %s948
              %p945 = scmp.ge.s32.totalorder %s944, 1
              %s949 = sphi %s930, %s930
              %s950 = sphi %s931, %s931
            $region157: #{tpu_custom_call.1} parent=153 // loop_header_branch
              %947 = sbr.rel (%p945) target = $region161
            $region158: #{tpu_custom_call.1} parent=153 // loop_body
              %v951 = vld [vmem:[%s949] sm:%s942]
              %952 = vst [vmem:[%s950] sm:%s942] %v951
            $region159: #{tpu_custom_call.1} parent=153 // loop_footer
              %s948 = sadd.s32 1, %s944
            $region160: #{tpu_custom_call.1} parent=153 // loop_footer_branch
              %943 = sbr.rel target = $region156
            $region161: #{tpu_custom_call.1} parent=153 // loop_exit
              _
          $region154: #{tpu_custom_call.1} parent=143 // pred_fallthru
            _
          // Predicated region
          $region173: #{tpu_custom_call.1} parent=143 // pred_check
            _
          $region174: #{tpu_custom_call.1} parent=143 // pred_check_branch
            %977 = sbr.rel (0) target = $region176
          $region175: #{tpu_custom_call.1} parent=143 // pred_region
            %978 = vsyncadd %s932, 16
          $region176: #{tpu_custom_call.1} parent=143 // pred_fallthru
            _
        $region144: #{tpu_custom_call.1} parent=27 // loop_footer
          %s924 = sadd.s32 1, %s920
        $region145: #{tpu_custom_call.1} parent=27 // loop_footer_branch
          %919 = sbr.rel target = $region141
        $region146: #{tpu_custom_call.1} parent=27 // loop_exit
          _
        %s979 = scalar_lea.sflag [#allocation3], 1
        %s980 = sshll.u32 %s788, 4
        %981 = dma.done %s979, %s980
        %v982 = vld [vmem:[#allocation2 + $0x80] sm:$0xff]
        %v983 = vld [vmem:[#allocation2 + $0x88] sm:$0xff]
        %v984 = vld [vmem:[#allocation2 + $0x90] sm:$0xff]
        %v985 = vld [vmem:[#allocation2 + $0x98] sm:$0xff]
        %v986 = vld [vmem:[#allocation2 + $0xa0] sm:$0xff]
        %v987 = vld [vmem:[#allocation2 + $0xa8] sm:$0xff]
        %v988 = vld [vmem:[#allocation2 + $0xb0] sm:$0xff]
        %v989 = vld [vmem:[#allocation2 + $0xb8] sm:$0xff]
        %v990 = vld [vmem:[#allocation2 + $0xc0] sm:$0xff]
        %v991 = vld [vmem:[#allocation2 + $0xc8] sm:$0xff]
        %v992 = vld [vmem:[#allocation2 + $0xd0] sm:$0xff]
        %v993 = vld [vmem:[#allocation2 + $0xd8] sm:$0xff]
        %v994 = vld [vmem:[#allocation2 + $0xe0] sm:$0xff]
        %v995 = vld [vmem:[#allocation2 + $0xe8] sm:$0xff]
        %v996 = vld [vmem:[#allocation2 + $0xf0] sm:$0xff]
        %v997 = vld [vmem:[#allocation2 + $0xf8] sm:$0xff]
        %998 = vset.pattern.permute.xlu0 1
        %999 = vperm.xlu0 %998, %v712
        %v1000 = vpop.permute.xlu0 %999
        %1002 = vset.pattern.permute.xlu0 1
        %1003 = vperm.xlu0 %1002, %v713
        %v1004 = vpop.permute.xlu0 %1003
        %1006 = vset.pattern.permute.xlu0 1
        %1007 = vperm.xlu0 %1006, %v714
        %v1008 = vpop.permute.xlu0 %1007
        %1010 = vset.pattern.permute.xlu0 1
        %1011 = vperm.xlu0 %1010, %v715
        %v1012 = vpop.permute.xlu0 %1011
        %1014 = vset.pattern.permute.xlu0 1
        %1015 = vperm.xlu0 %1014, %v716
        %v1016 = vpop.permute.xlu0 %1015
        %1018 = vset.pattern.permute.xlu0 1
        %1019 = vperm.xlu0 %1018, %v717
        %v1020 = vpop.permute.xlu0 %1019
        %1022 = vset.pattern.permute.xlu0 1
        %1023 = vperm.xlu0 %1022, %v718
        %v1024 = vpop.permute.xlu0 %1023
        %1026 = vset.pattern.permute.xlu0 1
        %1027 = vperm.xlu0 %1026, %v719
        %v1028 = vpop.permute.xlu0 %1027
        %1030 = vset.pattern.permute.xlu0 1
        %1031 = vperm.xlu0 %1030, %v720
        %v1032 = vpop.permute.xlu0 %1031
        %1034 = vset.pattern.permute.xlu0 1
        %1035 = vperm.xlu0 %1034, %v721
        %v1036 = vpop.permute.xlu0 %1035
        %1038 = vset.pattern.permute.xlu0 1
        %1039 = vperm.xlu0 %1038, %v722
        %v1040 = vpop.permute.xlu0 %1039
        %1042 = vset.pattern.permute.xlu0 1
        %1043 = vperm.xlu0 %1042, %v723
        %v1044 = vpop.permute.xlu0 %1043
        %1046 = vset.pattern.permute.xlu0 1
        %1047 = vperm.xlu0 %1046, %v724
        %v1048 = vpop.permute.xlu0 %1047
        %1050 = vset.pattern.permute.xlu0 1
        %1051 = vperm.xlu0 %1050, %v725
        %v1052 = vpop.permute.xlu0 %1051
        %1054 = vset.pattern.permute.xlu0 1
        %1055 = vperm.xlu0 %1054, %v726
        %v1056 = vpop.permute.xlu0 %1055
        %1058 = vset.pattern.permute.xlu0 1
        %1059 = vperm.xlu0 %1058, %v727
        %v1060 = vpop.permute.xlu0 %1059
        %v1062 = vmul.f32 %v1000, %v982
        %v1063 = vmul.f32 %v1004, %v983
        %v1064 = vmul.f32 %v1008, %v984
        %v1065 = vmul.f32 %v1012, %v985
        %v1066 = vmul.f32 %v1016, %v986
        %v1067 = vmul.f32 %v1020, %v987
        %v1068 = vmul.f32 %v1024, %v988
        %v1069 = vmul.f32 %v1028, %v989
        %v1070 = vmul.f32 %v1032, %v990
        %v1071 = vmul.f32 %v1036, %v991
        %v1072 = vmul.f32 %v1040, %v992
        %v1073 = vmul.f32 %v1044, %v993
        %v1074 = vmul.f32 %v1048, %v994
        %v1075 = vmul.f32 %v1052, %v995
        %v1076 = vmul.f32 %v1056, %v996
        %v1077 = vmul.f32 %v1060, %v997
        %v1078 = vadd.f32 %v903, %v1062
        %v1079 = vadd.f32 %v904, %v1063
        %v1080 = vadd.f32 %v905, %v1064
        %v1081 = vadd.f32 %v906, %v1065
        %v1082 = vadd.f32 %v907, %v1066
        %v1083 = vadd.f32 %v908, %v1067
        %v1084 = vadd.f32 %v909, %v1068
        %v1085 = vadd.f32 %v910, %v1069
        %v1086 = vadd.f32 %v911, %v1070
        %v1087 = vadd.f32 %v912, %v1071
        %v1088 = vadd.f32 %v913, %v1072
        %v1089 = vadd.f32 %v914, %v1073
        %v1090 = vadd.f32 %v915, %v1074
        %v1091 = vadd.f32 %v916, %v1075
        %v1092 = vadd.f32 %v917, %v1076
        %v1093 = vadd.f32 %v918, %v1077
        loop: start=0, step=1, limit=128
        $region177: #{tpu_custom_call.1} parent=27 // loop_pre_header
          _
        $region178: #{tpu_custom_call.1} parent=27 // loop_header
          %s1095 = sphi 0, %s1099
          %p1096 = scmp.ge.s32.totalorder %s1095, 128
        $region179: #{tpu_custom_call.1} parent=27 // loop_header_branch
          %1098 = sbr.rel (%p1096) target = $region183
        $region180: #{tpu_custom_call.1} parent=27 // loop_body
          %s1100 = sadd.s32 %s175, %s1095
          %s1101 = smul.u32 %s1100, 8
          %s1102 = sadd.s32 %s1101, 4
          %s1103 = sld [smem:[#allocation5 + %s1102]]
          %s1104 = sadd.s32 %s1095, 512
          %s1105 = scalar_lea.vmem %s1, %s1103
          %s1106 = scalar_lea.vmem [#allocation2], %s1104
          %s1107 = scalar_lea.sflag [#allocation3], 4
          %p1109 = scmp.lt.u32.totalorder 1, 8
          %p1110 = pneg %p1109
          // Predicated region
          $region184: #{tpu_custom_call.1} parent=180 // pred_check
            _
          $region185: #{tpu_custom_call.1} parent=180 // pred_check_branch
            %1112 = sbr.rel (%p1109) target = $region187
          $region186: #{tpu_custom_call.1} parent=180 // pred_region
            %s1128 = sand.u32 1, 7
            %p1129 = scmp.eq.s32.totalorder %s1128, 0
            %p1130 = pneg %p1129
            // Predicated region
            $region199: #{tpu_custom_call.1} parent=186 // pred_check
              _
            $region200: #{tpu_custom_call.1} parent=186 // pred_check_branch
              %1132 = sbr.rel (%p1129) target = $region202
            $region201: #{tpu_custom_call.1} parent=186 // pred_region
              %s1133 = sand.u32 1, 7
              %s1134 = ssub.s32 1, %s1133
              %s1135 = scalar_lea.vmem %s1105, %s1134
              %s1136 = ssub.s32 1, %s1133
              %s1137 = scalar_lea.vmem %s1106, %s1136 [#allocation2]
              %s1138 = sshll.u32 1, %s1133
              %s1139 = ssub.s32 %s1138, 1
              loop: start=0, step=1, limit=1
              $region203: #{tpu_custom_call.1} parent=201 // loop_pre_header
                _
              $region204: #{tpu_custom_call.1} parent=201 // loop_header
                %s1141 = sphi 0, %s1145
                %p1142 = scmp.ge.s32.totalorder %s1141, 1
                %s1146 = sphi %s1135, %s1135
                %s1147 = sphi %s1137, %s1137
              $region205: #{tpu_custom_call.1} parent=201 // loop_header_branch
                %1144 = sbr.rel (%p1142) target = $region209
              $region206: #{tpu_custom_call.1} parent=201 // loop_body
                %v1148 = vld [vmem:[%s1146] sm:%s1139]
                %1149 = vst [vmem:[%s1147] sm:%s1139] %v1148
              $region207: #{tpu_custom_call.1} parent=201 // loop_footer
                %s1145 = sadd.s32 1, %s1141
              $region208: #{tpu_custom_call.1} parent=201 // loop_footer_branch
                %1140 = sbr.rel target = $region204
              $region209: #{tpu_custom_call.1} parent=201 // loop_exit
                _
            $region202: #{tpu_custom_call.1} parent=186 // pred_fallthru
              _
          $region187: #{tpu_custom_call.1} parent=180 // pred_fallthru
            _
          // Predicated region
          $region188: #{tpu_custom_call.1} parent=180 // pred_check
            %p1113 = pneg %p1109
          $region189: #{tpu_custom_call.1} parent=180 // pred_check_branch
            %1115 = sbr.rel (%p1113) target = $region191
          $region190: #{tpu_custom_call.1} parent=180 // pred_region
            %s1116 = sshll.u32 1, 1
            %s1117 = ssub.s32 %s1116, 1
            loop: start=0, step=1, limit=1
            $region192: #{tpu_custom_call.1} parent=190 // loop_pre_header
              _
            $region193: #{tpu_custom_call.1} parent=190 // loop_header
              %s1119 = sphi 0, %s1123
              %p1120 = scmp.ge.s32.totalorder %s1119, 1
              %s1124 = sphi %s1105, %s1105
              %s1125 = sphi %s1106, %s1106
            $region194: #{tpu_custom_call.1} parent=190 // loop_header_branch
              %1122 = sbr.rel (%p1120) target = $region198
            $region195: #{tpu_custom_call.1} parent=190 // loop_body
              %v1126 = vld [vmem:[%s1124] sm:%s1117]
              %1127 = vst [vmem:[%s1125] sm:%s1117] %v1126
            $region196: #{tpu_custom_call.1} parent=190 // loop_footer
              %s1123 = sadd.s32 1, %s1119
            $region197: #{tpu_custom_call.1} parent=190 // loop_footer_branch
              %1118 = sbr.rel target = $region193
            $region198: #{tpu_custom_call.1} parent=190 // loop_exit
              _
          $region191: #{tpu_custom_call.1} parent=180 // pred_fallthru
            _
          // Predicated region
          $region210: #{tpu_custom_call.1} parent=180 // pred_check
            _
          $region211: #{tpu_custom_call.1} parent=180 // pred_check_branch
            %1152 = sbr.rel (0) target = $region213
          $region212: #{tpu_custom_call.1} parent=180 // pred_region
            %1153 = vsyncadd %s1107, 16
          $region213: #{tpu_custom_call.1} parent=180 // pred_fallthru
            _
        $region181: #{tpu_custom_call.1} parent=27 // loop_footer
          %s1099 = sadd.s32 1, %s1095
        $region182: #{tpu_custom_call.1} parent=27 // loop_footer_branch
          %1094 = sbr.rel target = $region178
        $region183: #{tpu_custom_call.1} parent=27 // loop_exit
          _
        %s1154 = scalar_lea.sflag [#allocation3], 2
        %s1155 = sshll.u32 %s788, 4
        %1156 = dma.done %s1154, %s1155
        %v1157 = vld [vmem:[#allocation2 + $0x100] sm:$0xff]
        %v1158 = vld [vmem:[#allocation2 + $0x108] sm:$0xff]
        %v1159 = vld [vmem:[#allocation2 + $0x110] sm:$0xff]
        %v1160 = vld [vmem:[#allocation2 + $0x118] sm:$0xff]
        %v1161 = vld [vmem:[#allocation2 + $0x120] sm:$0xff]
        %v1162 = vld [vmem:[#allocation2 + $0x128] sm:$0xff]
        %v1163 = vld [vmem:[#allocation2 + $0x130] sm:$0xff]
        %v1164 = vld [vmem:[#allocation2 + $0x138] sm:$0xff]
        %v1165 = vld [vmem:[#allocation2 + $0x140] sm:$0xff]
        %v1166 = vld [vmem:[#allocation2 + $0x148] sm:$0xff]
        %v1167 = vld [vmem:[#allocation2 + $0x150] sm:$0xff]
        %v1168 = vld [vmem:[#allocation2 + $0x158] sm:$0xff]
        %v1169 = vld [vmem:[#allocation2 + $0x160] sm:$0xff]
        %v1170 = vld [vmem:[#allocation2 + $0x168] sm:$0xff]
        %v1171 = vld [vmem:[#allocation2 + $0x170] sm:$0xff]
        %v1172 = vld [vmem:[#allocation2 + $0x178] sm:$0xff]
        %1173 = vset.pattern.permute.xlu0 2
        %1174 = vperm.xlu0 %1173, %v712
        %v1175 = vpop.permute.xlu0 %1174
        %1177 = vset.pattern.permute.xlu0 2
        %1178 = vperm.xlu0 %1177, %v713
        %v1179 = vpop.permute.xlu0 %1178
        %1181 = vset.pattern.permute.xlu0 2
        %1182 = vperm.xlu0 %1181, %v714
        %v1183 = vpop.permute.xlu0 %1182
        %1185 = vset.pattern.permute.xlu0 2
        %1186 = vperm.xlu0 %1185, %v715
        %v1187 = vpop.permute.xlu0 %1186
        %1189 = vset.pattern.permute.xlu0 2
        %1190 = vperm.xlu0 %1189, %v716
        %v1191 = vpop.permute.xlu0 %1190
        %1193 = vset.pattern.permute.xlu0 2
        %1194 = vperm.xlu0 %1193, %v717
        %v1195 = vpop.permute.xlu0 %1194
        %1197 = vset.pattern.permute.xlu0 2
        %1198 = vperm.xlu0 %1197, %v718
        %v1199 = vpop.permute.xlu0 %1198
        %1201 = vset.pattern.permute.xlu0 2
        %1202 = vperm.xlu0 %1201, %v719
        %v1203 = vpop.permute.xlu0 %1202
        %1205 = vset.pattern.permute.xlu0 2
        %1206 = vperm.xlu0 %1205, %v720
        %v1207 = vpop.permute.xlu0 %1206
        %1209 = vset.pattern.permute.xlu0 2
        %1210 = vperm.xlu0 %1209, %v721
        %v1211 = vpop.permute.xlu0 %1210
        %1213 = vset.pattern.permute.xlu0 2
        %1214 = vperm.xlu0 %1213, %v722
        %v1215 = vpop.permute.xlu0 %1214
        %1217 = vset.pattern.permute.xlu0 2
        %1218 = vperm.xlu0 %1217, %v723
        %v1219 = vpop.permute.xlu0 %1218
        %1221 = vset.pattern.permute.xlu0 2
        %1222 = vperm.xlu0 %1221, %v724
        %v1223 = vpop.permute.xlu0 %1222
        %1225 = vset.pattern.permute.xlu0 2
        %1226 = vperm.xlu0 %1225, %v725
        %v1227 = vpop.permute.xlu0 %1226
        %1229 = vset.pattern.permute.xlu0 2
        %1230 = vperm.xlu0 %1229, %v726
        %v1231 = vpop.permute.xlu0 %1230
        %1233 = vset.pattern.permute.xlu0 2
        %1234 = vperm.xlu0 %1233, %v727
        %v1235 = vpop.permute.xlu0 %1234
        %v1237 = vmul.f32 %v1175, %v1157
        %v1238 = vmul.f32 %v1179, %v1158
        %v1239 = vmul.f32 %v1183, %v1159
        %v1240 = vmul.f32 %v1187, %v1160
        %v1241 = vmul.f32 %v1191, %v1161
        %v1242 = vmul.f32 %v1195, %v1162
        %v1243 = vmul.f32 %v1199, %v1163
        %v1244 = vmul.f32 %v1203, %v1164
        %v1245 = vmul.f32 %v1207, %v1165
        %v1246 = vmul.f32 %v1211, %v1166
        %v1247 = vmul.f32 %v1215, %v1167
        %v1248 = vmul.f32 %v1219, %v1168
        %v1249 = vmul.f32 %v1223, %v1169
        %v1250 = vmul.f32 %v1227, %v1170
        %v1251 = vmul.f32 %v1231, %v1171
        %v1252 = vmul.f32 %v1235, %v1172
        %v1253 = vadd.f32 %v1078, %v1237
        %v1254 = vadd.f32 %v1079, %v1238
        %v1255 = vadd.f32 %v1080, %v1239
        %v1256 = vadd.f32 %v1081, %v1240
        %v1257 = vadd.f32 %v1082, %v1241
        %v1258 = vadd.f32 %v1083, %v1242
        %v1259 = vadd.f32 %v1084, %v1243
        %v1260 = vadd.f32 %v1085, %v1244
        %v1261 = vadd.f32 %v1086, %v1245
        %v1262 = vadd.f32 %v1087, %v1246
        %v1263 = vadd.f32 %v1088, %v1247
        %v1264 = vadd.f32 %v1089, %v1248
        %v1265 = vadd.f32 %v1090, %v1249
        %v1266 = vadd.f32 %v1091, %v1250
        %v1267 = vadd.f32 %v1092, %v1251
        %v1268 = vadd.f32 %v1093, %v1252
        loop: start=0, step=1, limit=128
        $region214: #{tpu_custom_call.1} parent=27 // loop_pre_header
          _
        $region215: #{tpu_custom_call.1} parent=27 // loop_header
          %s1270 = sphi 0, %s1274
          %p1271 = scmp.ge.s32.totalorder %s1270, 128
        $region216: #{tpu_custom_call.1} parent=27 // loop_header_branch
          %1273 = sbr.rel (%p1271) target = $region220
        $region217: #{tpu_custom_call.1} parent=27 // loop_body
          %s1275 = sadd.s32 %s175, %s1270
          %s1276 = smul.u32 %s1275, 8
          %s1277 = sadd.s32 %s1276, 5
          %s1278 = sld [smem:[#allocation5 + %s1277]]
          %s1279 = sadd.s32 %s1270, 640
          %s1280 = scalar_lea.vmem %s1, %s1278
          %s1281 = scalar_lea.vmem [#allocation2], %s1279
          %s1282 = scalar_lea.sflag [#allocation3], 5
          %p1284 = scmp.lt.u32.totalorder 1, 8
          %p1285 = pneg %p1284
          // Predicated region
          $region221: #{tpu_custom_call.1} parent=217 // pred_check
            _
          $region222: #{tpu_custom_call.1} parent=217 // pred_check_branch
            %1287 = sbr.rel (%p1284) target = $region224
          $region223: #{tpu_custom_call.1} parent=217 // pred_region
            %s1303 = sand.u32 1, 7
            %p1304 = scmp.eq.s32.totalorder %s1303, 0
            %p1305 = pneg %p1304
            // Predicated region
            $region236: #{tpu_custom_call.1} parent=223 // pred_check
              _
            $region237: #{tpu_custom_call.1} parent=223 // pred_check_branch
              %1307 = sbr.rel (%p1304) target = $region239
            $region238: #{tpu_custom_call.1} parent=223 // pred_region
              %s1308 = sand.u32 1, 7
              %s1309 = ssub.s32 1, %s1308
              %s1310 = scalar_lea.vmem %s1280, %s1309
              %s1311 = ssub.s32 1, %s1308
              %s1312 = scalar_lea.vmem %s1281, %s1311 [#allocation2]
              %s1313 = sshll.u32 1, %s1308
              %s1314 = ssub.s32 %s1313, 1
              loop: start=0, step=1, limit=1
              $region240: #{tpu_custom_call.1} parent=238 // loop_pre_header
                _
              $region241: #{tpu_custom_call.1} parent=238 // loop_header
                %s1316 = sphi 0, %s1320
                %p1317 = scmp.ge.s32.totalorder %s1316, 1
                %s1321 = sphi %s1310, %s1310
                %s1322 = sphi %s1312, %s1312
              $region242: #{tpu_custom_call.1} parent=238 // loop_header_branch
                %1319 = sbr.rel (%p1317) target = $region246
              $region243: #{tpu_custom_call.1} parent=238 // loop_body
                %v1323 = vld [vmem:[%s1321] sm:%s1314]
                %1324 = vst [vmem:[%s1322] sm:%s1314] %v1323
              $region244: #{tpu_custom_call.1} parent=238 // loop_footer
                %s1320 = sadd.s32 1, %s1316
              $region245: #{tpu_custom_call.1} parent=238 // loop_footer_branch
                %1315 = sbr.rel target = $region241
              $region246: #{tpu_custom_call.1} parent=238 // loop_exit
                _
            $region239: #{tpu_custom_call.1} parent=223 // pred_fallthru
              _
          $region224: #{tpu_custom_call.1} parent=217 // pred_fallthru
            _
          // Predicated region
          $region225: #{tpu_custom_call.1} parent=217 // pred_check
            %p1288 = pneg %p1284
          $region226: #{tpu_custom_call.1} parent=217 // pred_check_branch
            %1290 = sbr.rel (%p1288) target = $region228
          $region227: #{tpu_custom_call.1} parent=217 // pred_region
            %s1291 = sshll.u32 1, 1
            %s1292 = ssub.s32 %s1291, 1
            loop: start=0, step=1, limit=1
            $region229: #{tpu_custom_call.1} parent=227 // loop_pre_header
              _
            $region230: #{tpu_custom_call.1} parent=227 // loop_header
              %s1294 = sphi 0, %s1298
              %p1295 = scmp.ge.s32.totalorder %s1294, 1
              %s1299 = sphi %s1280, %s1280
              %s1300 = sphi %s1281, %s1281
            $region231: #{tpu_custom_call.1} parent=227 // loop_header_branch
              %1297 = sbr.rel (%p1295) target = $region235
            $region232: #{tpu_custom_call.1} parent=227 // loop_body
              %v1301 = vld [vmem:[%s1299] sm:%s1292]
              %1302 = vst [vmem:[%s1300] sm:%s1292] %v1301
            $region233: #{tpu_custom_call.1} parent=227 // loop_footer
              %s1298 = sadd.s32 1, %s1294
            $region234: #{tpu_custom_call.1} parent=227 // loop_footer_branch
              %1293 = sbr.rel target = $region230
            $region235: #{tpu_custom_call.1} parent=227 // loop_exit
              _
          $region228: #{tpu_custom_call.1} parent=217 // pred_fallthru
            _
          // Predicated region
          $region247: #{tpu_custom_call.1} parent=217 // pred_check
            _
          $region248: #{tpu_custom_call.1} parent=217 // pred_check_branch
            %1327 = sbr.rel (0) target = $region250
          $region249: #{tpu_custom_call.1} parent=217 // pred_region
            %1328 = vsyncadd %s1282, 16
          $region250: #{tpu_custom_call.1} parent=217 // pred_fallthru
            _
        $region218: #{tpu_custom_call.1} parent=27 // loop_footer
          %s1274 = sadd.s32 1, %s1270
        $region219: #{tpu_custom_call.1} parent=27 // loop_footer_branch
          %1269 = sbr.rel target = $region215
        $region220: #{tpu_custom_call.1} parent=27 // loop_exit
          _
        %s1329 = scalar_lea.sflag [#allocation3], 3
        %s1330 = sshll.u32 %s788, 4
        %1331 = dma.done %s1329, %s1330
        %v1332 = vld [vmem:[#allocation2 + $0x180] sm:$0xff]
        %v1333 = vld [vmem:[#allocation2 + $0x188] sm:$0xff]
        %v1334 = vld [vmem:[#allocation2 + $0x190] sm:$0xff]
        %v1335 = vld [vmem:[#allocation2 + $0x198] sm:$0xff]
        %v1336 = vld [vmem:[#allocation2 + $0x1a0] sm:$0xff]
        %v1337 = vld [vmem:[#allocation2 + $0x1a8] sm:$0xff]
        %v1338 = vld [vmem:[#allocation2 + $0x1b0] sm:$0xff]
        %v1339 = vld [vmem:[#allocation2 + $0x1b8] sm:$0xff]
        %v1340 = vld [vmem:[#allocation2 + $0x1c0] sm:$0xff]
        %v1341 = vld [vmem:[#allocation2 + $0x1c8] sm:$0xff]
        %v1342 = vld [vmem:[#allocation2 + $0x1d0] sm:$0xff]
        %v1343 = vld [vmem:[#allocation2 + $0x1d8] sm:$0xff]
        %v1344 = vld [vmem:[#allocation2 + $0x1e0] sm:$0xff]
        %v1345 = vld [vmem:[#allocation2 + $0x1e8] sm:$0xff]
        %v1346 = vld [vmem:[#allocation2 + $0x1f0] sm:$0xff]
        %v1347 = vld [vmem:[#allocation2 + $0x1f8] sm:$0xff]
        %1348 = vset.pattern.permute.xlu0 3
        %1349 = vperm.xlu0 %1348, %v712
        %v1350 = vpop.permute.xlu0 %1349
        %1352 = vset.pattern.permute.xlu0 3
        %1353 = vperm.xlu0 %1352, %v713
        %v1354 = vpop.permute.xlu0 %1353
        %1356 = vset.pattern.permute.xlu0 3
        %1357 = vperm.xlu0 %1356, %v714
        %v1358 = vpop.permute.xlu0 %1357
        %1360 = vset.pattern.permute.xlu0 3
        %1361 = vperm.xlu0 %1360, %v715
        %v1362 = vpop.permute.xlu0 %1361
        %1364 = vset.pattern.permute.xlu0 3
        %1365 = vperm.xlu0 %1364, %v716
        %v1366 = vpop.permute.xlu0 %1365
        %1368 = vset.pattern.permute.xlu0 3
        %1369 = vperm.xlu0 %1368, %v717
        %v1370 = vpop.permute.xlu0 %1369
        %1372 = vset.pattern.permute.xlu0 3
        %1373 = vperm.xlu0 %1372, %v718
        %v1374 = vpop.permute.xlu0 %1373
        %1376 = vset.pattern.permute.xlu0 3
        %1377 = vperm.xlu0 %1376, %v719
        %v1378 = vpop.permute.xlu0 %1377
        %1380 = vset.pattern.permute.xlu0 3
        %1381 = vperm.xlu0 %1380, %v720
        %v1382 = vpop.permute.xlu0 %1381
        %1384 = vset.pattern.permute.xlu0 3
        %1385 = vperm.xlu0 %1384, %v721
        %v1386 = vpop.permute.xlu0 %1385
        %1388 = vset.pattern.permute.xlu0 3
        %1389 = vperm.xlu0 %1388, %v722
        %v1390 = vpop.permute.xlu0 %1389
        %1392 = vset.pattern.permute.xlu0 3
        %1393 = vperm.xlu0 %1392, %v723
        %v1394 = vpop.permute.xlu0 %1393
        %1396 = vset.pattern.permute.xlu0 3
        %1397 = vperm.xlu0 %1396, %v724
        %v1398 = vpop.permute.xlu0 %1397
        %1400 = vset.pattern.permute.xlu0 3
        %1401 = vperm.xlu0 %1400, %v725
        %v1402 = vpop.permute.xlu0 %1401
        %1404 = vset.pattern.permute.xlu0 3
        %1405 = vperm.xlu0 %1404, %v726
        %v1406 = vpop.permute.xlu0 %1405
        %1408 = vset.pattern.permute.xlu0 3
        %1409 = vperm.xlu0 %1408, %v727
        %v1410 = vpop.permute.xlu0 %1409
        %v1412 = vmul.f32 %v1350, %v1332
        %v1413 = vmul.f32 %v1354, %v1333
        %v1414 = vmul.f32 %v1358, %v1334
        %v1415 = vmul.f32 %v1362, %v1335
        %v1416 = vmul.f32 %v1366, %v1336
        %v1417 = vmul.f32 %v1370, %v1337
        %v1418 = vmul.f32 %v1374, %v1338
        %v1419 = vmul.f32 %v1378, %v1339
        %v1420 = vmul.f32 %v1382, %v1340
        %v1421 = vmul.f32 %v1386, %v1341
        %v1422 = vmul.f32 %v1390, %v1342
        %v1423 = vmul.f32 %v1394, %v1343
        %v1424 = vmul.f32 %v1398, %v1344
        %v1425 = vmul.f32 %v1402, %v1345
        %v1426 = vmul.f32 %v1406, %v1346
        %v1427 = vmul.f32 %v1410, %v1347
        %v1428 = vadd.f32 %v1253, %v1412
        %v1429 = vadd.f32 %v1254, %v1413
        %v1430 = vadd.f32 %v1255, %v1414
        %v1431 = vadd.f32 %v1256, %v1415
        %v1432 = vadd.f32 %v1257, %v1416
        %v1433 = vadd.f32 %v1258, %v1417
        %v1434 = vadd.f32 %v1259, %v1418
        %v1435 = vadd.f32 %v1260, %v1419
        %v1436 = vadd.f32 %v1261, %v1420
        %v1437 = vadd.f32 %v1262, %v1421
        %v1438 = vadd.f32 %v1263, %v1422
        %v1439 = vadd.f32 %v1264, %v1423
        %v1440 = vadd.f32 %v1265, %v1424
        %v1441 = vadd.f32 %v1266, %v1425
        %v1442 = vadd.f32 %v1267, %v1426
        %v1443 = vadd.f32 %v1268, %v1427
        loop: start=0, step=1, limit=128
        $region251: #{tpu_custom_call.1} parent=27 // loop_pre_header
          _
        $region252: #{tpu_custom_call.1} parent=27 // loop_header
          %s1445 = sphi 0, %s1449
          %p1446 = scmp.ge.s32.totalorder %s1445, 128
        $region253: #{tpu_custom_call.1} parent=27 // loop_header_branch
          %1448 = sbr.rel (%p1446) target = $region257
        $region254: #{tpu_custom_call.1} parent=27 // loop_body
          %s1450 = sadd.s32 %s175, %s1445
          %s1451 = smul.u32 %s1450, 8
          %s1452 = sadd.s32 %s1451, 6
          %s1453 = sld [smem:[#allocation5 + %s1452]]
          %s1454 = sadd.s32 %s1445, 768
          %s1455 = scalar_lea.vmem %s1, %s1453
          %s1456 = scalar_lea.vmem [#allocation2], %s1454
          %s1457 = scalar_lea.sflag [#allocation3], 6
          %p1459 = scmp.lt.u32.totalorder 1, 8
          %p1460 = pneg %p1459
          // Predicated region
          $region258: #{tpu_custom_call.1} parent=254 // pred_check
            _
          $region259: #{tpu_custom_call.1} parent=254 // pred_check_branch
            %1462 = sbr.rel (%p1459) target = $region261
          $region260: #{tpu_custom_call.1} parent=254 // pred_region
            %s1478 = sand.u32 1, 7
            %p1479 = scmp.eq.s32.totalorder %s1478, 0
            %p1480 = pneg %p1479
            // Predicated region
            $region273: #{tpu_custom_call.1} parent=260 // pred_check
              _
            $region274: #{tpu_custom_call.1} parent=260 // pred_check_branch
              %1482 = sbr.rel (%p1479) target = $region276
            $region275: #{tpu_custom_call.1} parent=260 // pred_region
              %s1483 = sand.u32 1, 7
              %s1484 = ssub.s32 1, %s1483
              %s1485 = scalar_lea.vmem %s1455, %s1484
              %s1486 = ssub.s32 1, %s1483
              %s1487 = scalar_lea.vmem %s1456, %s1486 [#allocation2]
              %s1488 = sshll.u32 1, %s1483
              %s1489 = ssub.s32 %s1488, 1
              loop: start=0, step=1, limit=1
              $region277: #{tpu_custom_call.1} parent=275 // loop_pre_header
                _
              $region278: #{tpu_custom_call.1} parent=275 // loop_header
                %s1491 = sphi 0, %s1495
                %p1492 = scmp.ge.s32.totalorder %s1491, 1
                %s1496 = sphi %s1485, %s1485
                %s1497 = sphi %s1487, %s1487
              $region279: #{tpu_custom_call.1} parent=275 // loop_header_branch
                %1494 = sbr.rel (%p1492) target = $region283
              $region280: #{tpu_custom_call.1} parent=275 // loop_body
                %v1498 = vld [vmem:[%s1496] sm:%s1489]
                %1499 = vst [vmem:[%s1497] sm:%s1489] %v1498
              $region281: #{tpu_custom_call.1} parent=275 // loop_footer
                %s1495 = sadd.s32 1, %s1491
              $region282: #{tpu_custom_call.1} parent=275 // loop_footer_branch
                %1490 = sbr.rel target = $region278
              $region283: #{tpu_custom_call.1} parent=275 // loop_exit
                _
            $region276: #{tpu_custom_call.1} parent=260 // pred_fallthru
              _
          $region261: #{tpu_custom_call.1} parent=254 // pred_fallthru
            _
          // Predicated region
          $region262: #{tpu_custom_call.1} parent=254 // pred_check
            %p1463 = pneg %p1459
          $region263: #{tpu_custom_call.1} parent=254 // pred_check_branch
            %1465 = sbr.rel (%p1463) target = $region265
          $region264: #{tpu_custom_call.1} parent=254 // pred_region
            %s1466 = sshll.u32 1, 1
            %s1467 = ssub.s32 %s1466, 1
            loop: start=0, step=1, limit=1
            $region266: #{tpu_custom_call.1} parent=264 // loop_pre_header
              _
            $region267: #{tpu_custom_call.1} parent=264 // loop_header
              %s1469 = sphi 0, %s1473
              %p1470 = scmp.ge.s32.totalorder %s1469, 1
              %s1474 = sphi %s1455, %s1455
              %s1475 = sphi %s1456, %s1456
            $region268: #{tpu_custom_call.1} parent=264 // loop_header_branch
              %1472 = sbr.rel (%p1470) target = $region272
            $region269: #{tpu_custom_call.1} parent=264 // loop_body
              %v1476 = vld [vmem:[%s1474] sm:%s1467]
              %1477 = vst [vmem:[%s1475] sm:%s1467] %v1476
            $region270: #{tpu_custom_call.1} parent=264 // loop_footer
              %s1473 = sadd.s32 1, %s1469
            $region271: #{tpu_custom_call.1} parent=264 // loop_footer_branch
              %1468 = sbr.rel target = $region267
            $region272: #{tpu_custom_call.1} parent=264 // loop_exit
              _
          $region265: #{tpu_custom_call.1} parent=254 // pred_fallthru
            _
          // Predicated region
          $region284: #{tpu_custom_call.1} parent=254 // pred_check
            _
          $region285: #{tpu_custom_call.1} parent=254 // pred_check_branch
            %1502 = sbr.rel (0) target = $region287
          $region286: #{tpu_custom_call.1} parent=254 // pred_region
            %1503 = vsyncadd %s1457, 16
          $region287: #{tpu_custom_call.1} parent=254 // pred_fallthru
            _
        $region255: #{tpu_custom_call.1} parent=27 // loop_footer
          %s1449 = sadd.s32 1, %s1445
        $region256: #{tpu_custom_call.1} parent=27 // loop_footer_branch
          %1444 = sbr.rel target = $region252
        $region257: #{tpu_custom_call.1} parent=27 // loop_exit
          _
        %s1504 = scalar_lea.sflag [#allocation3], 4
        %s1505 = sshll.u32 %s788, 4
        %1506 = dma.done %s1504, %s1505
        %v1507 = vld [vmem:[#allocation2 + $0x200] sm:$0xff]
        %v1508 = vld [vmem:[#allocation2 + $0x208] sm:$0xff]
        %v1509 = vld [vmem:[#allocation2 + $0x210] sm:$0xff]
        %v1510 = vld [vmem:[#allocation2 + $0x218] sm:$0xff]
        %v1511 = vld [vmem:[#allocation2 + $0x220] sm:$0xff]
        %v1512 = vld [vmem:[#allocation2 + $0x228] sm:$0xff]
        %v1513 = vld [vmem:[#allocation2 + $0x230] sm:$0xff]
        %v1514 = vld [vmem:[#allocation2 + $0x238] sm:$0xff]
        %v1515 = vld [vmem:[#allocation2 + $0x240] sm:$0xff]
        %v1516 = vld [vmem:[#allocation2 + $0x248] sm:$0xff]
        %v1517 = vld [vmem:[#allocation2 + $0x250] sm:$0xff]
        %v1518 = vld [vmem:[#allocation2 + $0x258] sm:$0xff]
        %v1519 = vld [vmem:[#allocation2 + $0x260] sm:$0xff]
        %v1520 = vld [vmem:[#allocation2 + $0x268] sm:$0xff]
        %v1521 = vld [vmem:[#allocation2 + $0x270] sm:$0xff]
        %v1522 = vld [vmem:[#allocation2 + $0x278] sm:$0xff]
        %1523 = vset.pattern.permute.xlu0 4
        %1524 = vperm.xlu0 %1523, %v712
        %v1525 = vpop.permute.xlu0 %1524
        %1527 = vset.pattern.permute.xlu0 4
        %1528 = vperm.xlu0 %1527, %v713
        %v1529 = vpop.permute.xlu0 %1528
        %1531 = vset.pattern.permute.xlu0 4
        %1532 = vperm.xlu0 %1531, %v714
        %v1533 = vpop.permute.xlu0 %1532
        %1535 = vset.pattern.permute.xlu0 4
        %1536 = vperm.xlu0 %1535, %v715
        %v1537 = vpop.permute.xlu0 %1536
        %1539 = vset.pattern.permute.xlu0 4
        %1540 = vperm.xlu0 %1539, %v716
        %v1541 = vpop.permute.xlu0 %1540
        %1543 = vset.pattern.permute.xlu0 4
        %1544 = vperm.xlu0 %1543, %v717
        %v1545 = vpop.permute.xlu0 %1544
        %1547 = vset.pattern.permute.xlu0 4
        %1548 = vperm.xlu0 %1547, %v718
        %v1549 = vpop.permute.xlu0 %1548
        %1551 = vset.pattern.permute.xlu0 4
        %1552 = vperm.xlu0 %1551, %v719
        %v1553 = vpop.permute.xlu0 %1552
        %1555 = vset.pattern.permute.xlu0 4
        %1556 = vperm.xlu0 %1555, %v720
        %v1557 = vpop.permute.xlu0 %1556
        %1559 = vset.pattern.permute.xlu0 4
        %1560 = vperm.xlu0 %1559, %v721
        %v1561 = vpop.permute.xlu0 %1560
        %1563 = vset.pattern.permute.xlu0 4
        %1564 = vperm.xlu0 %1563, %v722
        %v1565 = vpop.permute.xlu0 %1564
        %1567 = vset.pattern.permute.xlu0 4
        %1568 = vperm.xlu0 %1567, %v723
        %v1569 = vpop.permute.xlu0 %1568
        %1571 = vset.pattern.permute.xlu0 4
        %1572 = vperm.xlu0 %1571, %v724
        %v1573 = vpop.permute.xlu0 %1572
        %1575 = vset.pattern.permute.xlu0 4
        %1576 = vperm.xlu0 %1575, %v725
        %v1577 = vpop.permute.xlu0 %1576
        %1579 = vset.pattern.permute.xlu0 4
        %1580 = vperm.xlu0 %1579, %v726
        %v1581 = vpop.permute.xlu0 %1580
        %1583 = vset.pattern.permute.xlu0 4
        %1584 = vperm.xlu0 %1583, %v727
        %v1585 = vpop.permute.xlu0 %1584
        %v1587 = vmul.f32 %v1525, %v1507
        %v1588 = vmul.f32 %v1529, %v1508
        %v1589 = vmul.f32 %v1533, %v1509
        %v1590 = vmul.f32 %v1537, %v1510
        %v1591 = vmul.f32 %v1541, %v1511
        %v1592 = vmul.f32 %v1545, %v1512
        %v1593 = vmul.f32 %v1549, %v1513
        %v1594 = vmul.f32 %v1553, %v1514
        %v1595 = vmul.f32 %v1557, %v1515
        %v1596 = vmul.f32 %v1561, %v1516
        %v1597 = vmul.f32 %v1565, %v1517
        %v1598 = vmul.f32 %v1569, %v1518
        %v1599 = vmul.f32 %v1573, %v1519
        %v1600 = vmul.f32 %v1577, %v1520
        %v1601 = vmul.f32 %v1581, %v1521
        %v1602 = vmul.f32 %v1585, %v1522
        %v1603 = vadd.f32 %v1428, %v1587
        %v1604 = vadd.f32 %v1429, %v1588
        %v1605 = vadd.f32 %v1430, %v1589
        %v1606 = vadd.f32 %v1431, %v1590
        %v1607 = vadd.f32 %v1432, %v1591
        %v1608 = vadd.f32 %v1433, %v1592
        %v1609 = vadd.f32 %v1434, %v1593
        %v1610 = vadd.f32 %v1435, %v1594
        %v1611 = vadd.f32 %v1436, %v1595
        %v1612 = vadd.f32 %v1437, %v1596
        %v1613 = vadd.f32 %v1438, %v1597
        %v1614 = vadd.f32 %v1439, %v1598
        %v1615 = vadd.f32 %v1440, %v1599
        %v1616 = vadd.f32 %v1441, %v1600
        %v1617 = vadd.f32 %v1442, %v1601
        %v1618 = vadd.f32 %v1443, %v1602
        loop: start=0, step=1, limit=128
        $region288: #{tpu_custom_call.1} parent=27 // loop_pre_header
          _
        $region289: #{tpu_custom_call.1} parent=27 // loop_header
          %s1620 = sphi 0, %s1624
          %p1621 = scmp.ge.s32.totalorder %s1620, 128
        $region290: #{tpu_custom_call.1} parent=27 // loop_header_branch
          %1623 = sbr.rel (%p1621) target = $region294
        $region291: #{tpu_custom_call.1} parent=27 // loop_body
          %s1625 = sadd.s32 %s175, %s1620
          %s1626 = smul.u32 %s1625, 8
          %s1627 = sadd.s32 %s1626, 7
          %s1628 = sld [smem:[#allocation5 + %s1627]]
          %s1629 = sadd.s32 %s1620, 896
          %s1630 = scalar_lea.vmem %s1, %s1628
          %s1631 = scalar_lea.vmem [#allocation2], %s1629
          %s1632 = scalar_lea.sflag [#allocation3], 7
          %p1634 = scmp.lt.u32.totalorder 1, 8
          %p1635 = pneg %p1634
          // Predicated region
          $region295: #{tpu_custom_call.1} parent=291 // pred_check
            _
          $region296: #{tpu_custom_call.1} parent=291 // pred_check_branch
            %1637 = sbr.rel (%p1634) target = $region298
          $region297: #{tpu_custom_call.1} parent=291 // pred_region
            %s1653 = sand.u32 1, 7
            %p1654 = scmp.eq.s32.totalorder %s1653, 0
            %p1655 = pneg %p1654
            // Predicated region
            $region310: #{tpu_custom_call.1} parent=297 // pred_check
              _
            $region311: #{tpu_custom_call.1} parent=297 // pred_check_branch
              %1657 = sbr.rel (%p1654) target = $region313
            $region312: #{tpu_custom_call.1} parent=297 // pred_region
              %s1658 = sand.u32 1, 7
              %s1659 = ssub.s32 1, %s1658
              %s1660 = scalar_lea.vmem %s1630, %s1659
              %s1661 = ssub.s32 1, %s1658
              %s1662 = scalar_lea.vmem %s1631, %s1661 [#allocation2]
              %s1663 = sshll.u32 1, %s1658
              %s1664 = ssub.s32 %s1663, 1
              loop: start=0, step=1, limit=1
              $region314: #{tpu_custom_call.1} parent=312 // loop_pre_header
                _
              $region315: #{tpu_custom_call.1} parent=312 // loop_header
                %s1666 = sphi 0, %s1670
                %p1667 = scmp.ge.s32.totalorder %s1666, 1
                %s1671 = sphi %s1660, %s1660
                %s1672 = sphi %s1662, %s1662
              $region316: #{tpu_custom_call.1} parent=312 // loop_header_branch
                %1669 = sbr.rel (%p1667) target = $region320
              $region317: #{tpu_custom_call.1} parent=312 // loop_body
                %v1673 = vld [vmem:[%s1671] sm:%s1664]
                %1674 = vst [vmem:[%s1672] sm:%s1664] %v1673
              $region318: #{tpu_custom_call.1} parent=312 // loop_footer
                %s1670 = sadd.s32 1, %s1666
              $region319: #{tpu_custom_call.1} parent=312 // loop_footer_branch
                %1665 = sbr.rel target = $region315
              $region320: #{tpu_custom_call.1} parent=312 // loop_exit
                _
            $region313: #{tpu_custom_call.1} parent=297 // pred_fallthru
              _
          $region298: #{tpu_custom_call.1} parent=291 // pred_fallthru
            _
          // Predicated region
          $region299: #{tpu_custom_call.1} parent=291 // pred_check
            %p1638 = pneg %p1634
          $region300: #{tpu_custom_call.1} parent=291 // pred_check_branch
            %1640 = sbr.rel (%p1638) target = $region302
          $region301: #{tpu_custom_call.1} parent=291 // pred_region
            %s1641 = sshll.u32 1, 1
            %s1642 = ssub.s32 %s1641, 1
            loop: start=0, step=1, limit=1
            $region303: #{tpu_custom_call.1} parent=301 // loop_pre_header
              _
            $region304: #{tpu_custom_call.1} parent=301 // loop_header
              %s1644 = sphi 0, %s1648
              %p1645 = scmp.ge.s32.totalorder %s1644, 1
              %s1649 = sphi %s1630, %s1630
              %s1650 = sphi %s1631, %s1631
            $region305: #{tpu_custom_call.1} parent=301 // loop_header_branch
              %1647 = sbr.rel (%p1645) target = $region309
            $region306: #{tpu_custom_call.1} parent=301 // loop_body
              %v1651 = vld [vmem:[%s1649] sm:%s1642]
              %1652 = vst [vmem:[%s1650] sm:%s1642] %v1651
            $region307: #{tpu_custom_call.1} parent=301 // loop_footer
              %s1648 = sadd.s32 1, %s1644
            $region308: #{tpu_custom_call.1} parent=301 // loop_footer_branch
              %1643 = sbr.rel target = $region304
            $region309: #{tpu_custom_call.1} parent=301 // loop_exit
              _
          $region302: #{tpu_custom_call.1} parent=291 // pred_fallthru
            _
          // Predicated region
          $region321: #{tpu_custom_call.1} parent=291 // pred_check
            _
          $region322: #{tpu_custom_call.1} parent=291 // pred_check_branch
            %1677 = sbr.rel (0) target = $region324
          $region323: #{tpu_custom_call.1} parent=291 // pred_region
            %1678 = vsyncadd %s1632, 16
          $region324: #{tpu_custom_call.1} parent=291 // pred_fallthru
            _
        $region292: #{tpu_custom_call.1} parent=27 // loop_footer
          %s1624 = sadd.s32 1, %s1620
        $region293: #{tpu_custom_call.1} parent=27 // loop_footer_branch
          %1619 = sbr.rel target = $region289
        $region294: #{tpu_custom_call.1} parent=27 // loop_exit
          _
        %s1679 = scalar_lea.sflag [#allocation3], 5
        %s1680 = sshll.u32 %s788, 4
        %1681 = dma.done %s1679, %s1680
        %v1682 = vld [vmem:[#allocation2 + $0x280] sm:$0xff]
        %v1683 = vld [vmem:[#allocation2 + $0x288] sm:$0xff]
        %v1684 = vld [vmem:[#allocation2 + $0x290] sm:$0xff]
        %v1685 = vld [vmem:[#allocation2 + $0x298] sm:$0xff]
        %v1686 = vld [vmem:[#allocation2 + $0x2a0] sm:$0xff]
        %v1687 = vld [vmem:[#allocation2 + $0x2a8] sm:$0xff]
        %v1688 = vld [vmem:[#allocation2 + $0x2b0] sm:$0xff]
        %v1689 = vld [vmem:[#allocation2 + $0x2b8] sm:$0xff]
        %v1690 = vld [vmem:[#allocation2 + $0x2c0] sm:$0xff]
        %v1691 = vld [vmem:[#allocation2 + $0x2c8] sm:$0xff]
        %v1692 = vld [vmem:[#allocation2 + $0x2d0] sm:$0xff]
        %v1693 = vld [vmem:[#allocation2 + $0x2d8] sm:$0xff]
        %v1694 = vld [vmem:[#allocation2 + $0x2e0] sm:$0xff]
        %v1695 = vld [vmem:[#allocation2 + $0x2e8] sm:$0xff]
        %v1696 = vld [vmem:[#allocation2 + $0x2f0] sm:$0xff]
        %v1697 = vld [vmem:[#allocation2 + $0x2f8] sm:$0xff]
        %1698 = vset.pattern.permute.xlu0 5
        %1699 = vperm.xlu0 %1698, %v712
        %v1700 = vpop.permute.xlu0 %1699
        %1702 = vset.pattern.permute.xlu0 5
        %1703 = vperm.xlu0 %1702, %v713
        %v1704 = vpop.permute.xlu0 %1703
        %1706 = vset.pattern.permute.xlu0 5
        %1707 = vperm.xlu0 %1706, %v714
        %v1708 = vpop.permute.xlu0 %1707
        %1710 = vset.pattern.permute.xlu0 5
        %1711 = vperm.xlu0 %1710, %v715
        %v1712 = vpop.permute.xlu0 %1711
        %1714 = vset.pattern.permute.xlu0 5
        %1715 = vperm.xlu0 %1714, %v716
        %v1716 = vpop.permute.xlu0 %1715
        %1718 = vset.pattern.permute.xlu0 5
        %1719 = vperm.xlu0 %1718, %v717
        %v1720 = vpop.permute.xlu0 %1719
        %1722 = vset.pattern.permute.xlu0 5
        %1723 = vperm.xlu0 %1722, %v718
        %v1724 = vpop.permute.xlu0 %1723
        %1726 = vset.pattern.permute.xlu0 5
        %1727 = vperm.xlu0 %1726, %v719
        %v1728 = vpop.permute.xlu0 %1727
        %1730 = vset.pattern.permute.xlu0 5
        %1731 = vperm.xlu0 %1730, %v720
        %v1732 = vpop.permute.xlu0 %1731
        %1734 = vset.pattern.permute.xlu0 5
        %1735 = vperm.xlu0 %1734, %v721
        %v1736 = vpop.permute.xlu0 %1735
        %1738 = vset.pattern.permute.xlu0 5
        %1739 = vperm.xlu0 %1738, %v722
        %v1740 = vpop.permute.xlu0 %1739
        %1742 = vset.pattern.permute.xlu0 5
        %1743 = vperm.xlu0 %1742, %v723
        %v1744 = vpop.permute.xlu0 %1743
        %1746 = vset.pattern.permute.xlu0 5
        %1747 = vperm.xlu0 %1746, %v724
        %v1748 = vpop.permute.xlu0 %1747
        %1750 = vset.pattern.permute.xlu0 5
        %1751 = vperm.xlu0 %1750, %v725
        %v1752 = vpop.permute.xlu0 %1751
        %1754 = vset.pattern.permute.xlu0 5
        %1755 = vperm.xlu0 %1754, %v726
        %v1756 = vpop.permute.xlu0 %1755
        %1758 = vset.pattern.permute.xlu0 5
        %1759 = vperm.xlu0 %1758, %v727
        %v1760 = vpop.permute.xlu0 %1759
        %v1762 = vmul.f32 %v1700, %v1682
        %v1763 = vmul.f32 %v1704, %v1683
        %v1764 = vmul.f32 %v1708, %v1684
        %v1765 = vmul.f32 %v1712, %v1685
        %v1766 = vmul.f32 %v1716, %v1686
        %v1767 = vmul.f32 %v1720, %v1687
        %v1768 = vmul.f32 %v1724, %v1688
        %v1769 = vmul.f32 %v1728, %v1689
        %v1770 = vmul.f32 %v1732, %v1690
        %v1771 = vmul.f32 %v1736, %v1691
        %v1772 = vmul.f32 %v1740, %v1692
        %v1773 = vmul.f32 %v1744, %v1693
        %v1774 = vmul.f32 %v1748, %v1694
        %v1775 = vmul.f32 %v1752, %v1695
        %v1776 = vmul.f32 %v1756, %v1696
        %v1777 = vmul.f32 %v1760, %v1697
        %v1778 = vadd.f32 %v1603, %v1762
        %v1779 = vadd.f32 %v1604, %v1763
        %v1780 = vadd.f32 %v1605, %v1764
        %v1781 = vadd.f32 %v1606, %v1765
        %v1782 = vadd.f32 %v1607, %v1766
        %v1783 = vadd.f32 %v1608, %v1767
        %v1784 = vadd.f32 %v1609, %v1768
        %v1785 = vadd.f32 %v1610, %v1769
        %v1786 = vadd.f32 %v1611, %v1770
        %v1787 = vadd.f32 %v1612, %v1771
        %v1788 = vadd.f32 %v1613, %v1772
        %v1789 = vadd.f32 %v1614, %v1773
        %v1790 = vadd.f32 %v1615, %v1774
        %v1791 = vadd.f32 %v1616, %v1775
        %v1792 = vadd.f32 %v1617, %v1776
        %v1793 = vadd.f32 %v1618, %v1777
        %s1794 = scalar_lea.sflag [#allocation3], 6
        %s1795 = sshll.u32 %s788, 4
        %1796 = dma.done %s1794, %s1795
        %v1797 = vld [vmem:[#allocation2 + $0x300] sm:$0xff]
        %v1798 = vld [vmem:[#allocation2 + $0x308] sm:$0xff]
        %v1799 = vld [vmem:[#allocation2 + $0x310] sm:$0xff]
        %v1800 = vld [vmem:[#allocation2 + $0x318] sm:$0xff]
        %v1801 = vld [vmem:[#allocation2 + $0x320] sm:$0xff]
        %v1802 = vld [vmem:[#allocation2 + $0x328] sm:$0xff]
        %v1803 = vld [vmem:[#allocation2 + $0x330] sm:$0xff]
        %v1804 = vld [vmem:[#allocation2 + $0x338] sm:$0xff]
        %v1805 = vld [vmem:[#allocation2 + $0x340] sm:$0xff]
        %v1806 = vld [vmem:[#allocation2 + $0x348] sm:$0xff]
        %v1807 = vld [vmem:[#allocation2 + $0x350] sm:$0xff]
        %v1808 = vld [vmem:[#allocation2 + $0x358] sm:$0xff]
        %v1809 = vld [vmem:[#allocation2 + $0x360] sm:$0xff]
        %v1810 = vld [vmem:[#allocation2 + $0x368] sm:$0xff]
        %v1811 = vld [vmem:[#allocation2 + $0x370] sm:$0xff]
        %v1812 = vld [vmem:[#allocation2 + $0x378] sm:$0xff]
        %1813 = vset.pattern.permute.xlu0 6
        %1814 = vperm.xlu0 %1813, %v712
        %v1815 = vpop.permute.xlu0 %1814
        %1817 = vset.pattern.permute.xlu0 6
        %1818 = vperm.xlu0 %1817, %v713
        %v1819 = vpop.permute.xlu0 %1818
        %1821 = vset.pattern.permute.xlu0 6
        %1822 = vperm.xlu0 %1821, %v714
        %v1823 = vpop.permute.xlu0 %1822
        %1825 = vset.pattern.permute.xlu0 6
        %1826 = vperm.xlu0 %1825, %v715
        %v1827 = vpop.permute.xlu0 %1826
        %1829 = vset.pattern.permute.xlu0 6
        %1830 = vperm.xlu0 %1829, %v716
        %v1831 = vpop.permute.xlu0 %1830
        %1833 = vset.pattern.permute.xlu0 6
        %1834 = vperm.xlu0 %1833, %v717
        %v1835 = vpop.permute.xlu0 %1834
        %1837 = vset.pattern.permute.xlu0 6
        %1838 = vperm.xlu0 %1837, %v718
        %v1839 = vpop.permute.xlu0 %1838
        %1841 = vset.pattern.permute.xlu0 6
        %1842 = vperm.xlu0 %1841, %v719
        %v1843 = vpop.permute.xlu0 %1842
        %1845 = vset.pattern.permute.xlu0 6
        %1846 = vperm.xlu0 %1845, %v720
        %v1847 = vpop.permute.xlu0 %1846
        %1849 = vset.pattern.permute.xlu0 6
        %1850 = vperm.xlu0 %1849, %v721
        %v1851 = vpop.permute.xlu0 %1850
        %1853 = vset.pattern.permute.xlu0 6
        %1854 = vperm.xlu0 %1853, %v722
        %v1855 = vpop.permute.xlu0 %1854
        %1857 = vset.pattern.permute.xlu0 6
        %1858 = vperm.xlu0 %1857, %v723
        %v1859 = vpop.permute.xlu0 %1858
        %1861 = vset.pattern.permute.xlu0 6
        %1862 = vperm.xlu0 %1861, %v724
        %v1863 = vpop.permute.xlu0 %1862
        %1865 = vset.pattern.permute.xlu0 6
        %1866 = vperm.xlu0 %1865, %v725
        %v1867 = vpop.permute.xlu0 %1866
        %1869 = vset.pattern.permute.xlu0 6
        %1870 = vperm.xlu0 %1869, %v726
        %v1871 = vpop.permute.xlu0 %1870
        %1873 = vset.pattern.permute.xlu0 6
        %1874 = vperm.xlu0 %1873, %v727
        %v1875 = vpop.permute.xlu0 %1874
        %v1877 = vmul.f32 %v1815, %v1797
        %v1878 = vmul.f32 %v1819, %v1798
        %v1879 = vmul.f32 %v1823, %v1799
        %v1880 = vmul.f32 %v1827, %v1800
        %v1881 = vmul.f32 %v1831, %v1801
        %v1882 = vmul.f32 %v1835, %v1802
        %v1883 = vmul.f32 %v1839, %v1803
        %v1884 = vmul.f32 %v1843, %v1804
        %v1885 = vmul.f32 %v1847, %v1805
        %v1886 = vmul.f32 %v1851, %v1806
        %v1887 = vmul.f32 %v1855, %v1807
        %v1888 = vmul.f32 %v1859, %v1808
        %v1889 = vmul.f32 %v1863, %v1809
        %v1890 = vmul.f32 %v1867, %v1810
        %v1891 = vmul.f32 %v1871, %v1811
        %v1892 = vmul.f32 %v1875, %v1812
        %v1893 = vadd.f32 %v1778, %v1877
        %v1894 = vadd.f32 %v1779, %v1878
        %v1895 = vadd.f32 %v1780, %v1879
        %v1896 = vadd.f32 %v1781, %v1880
        %v1897 = vadd.f32 %v1782, %v1881
        %v1898 = vadd.f32 %v1783, %v1882
        %v1899 = vadd.f32 %v1784, %v1883
        %v1900 = vadd.f32 %v1785, %v1884
        %v1901 = vadd.f32 %v1786, %v1885
        %v1902 = vadd.f32 %v1787, %v1886
        %v1903 = vadd.f32 %v1788, %v1887
        %v1904 = vadd.f32 %v1789, %v1888
        %v1905 = vadd.f32 %v1790, %v1889
        %v1906 = vadd.f32 %v1791, %v1890
        %v1907 = vadd.f32 %v1792, %v1891
        %v1908 = vadd.f32 %v1793, %v1892
        %s1909 = scalar_lea.sflag [#allocation3], 7
        %s1910 = sshll.u32 %s788, 4
        %1911 = dma.done %s1909, %s1910
        %v1912 = vld [vmem:[#allocation2 + $0x380] sm:$0xff]
        %v1913 = vld [vmem:[#allocation2 + $0x388] sm:$0xff]
        %v1914 = vld [vmem:[#allocation2 + $0x390] sm:$0xff]
        %v1915 = vld [vmem:[#allocation2 + $0x398] sm:$0xff]
        %v1916 = vld [vmem:[#allocation2 + $0x3a0] sm:$0xff]
        %v1917 = vld [vmem:[#allocation2 + $0x3a8] sm:$0xff]
        %v1918 = vld [vmem:[#allocation2 + $0x3b0] sm:$0xff]
        %v1919 = vld [vmem:[#allocation2 + $0x3b8] sm:$0xff]
        %v1920 = vld [vmem:[#allocation2 + $0x3c0] sm:$0xff]
        %v1921 = vld [vmem:[#allocation2 + $0x3c8] sm:$0xff]
        %v1922 = vld [vmem:[#allocation2 + $0x3d0] sm:$0xff]
        %v1923 = vld [vmem:[#allocation2 + $0x3d8] sm:$0xff]
        %v1924 = vld [vmem:[#allocation2 + $0x3e0] sm:$0xff]
        %v1925 = vld [vmem:[#allocation2 + $0x3e8] sm:$0xff]
        %v1926 = vld [vmem:[#allocation2 + $0x3f0] sm:$0xff]
        %v1927 = vld [vmem:[#allocation2 + $0x3f8] sm:$0xff]
        %1928 = vset.pattern.permute.xlu0 7
        %1929 = vperm.xlu0 %1928, %v712
        %v1930 = vpop.permute.xlu0 %1929
        %1932 = vset.pattern.permute.xlu0 7
        %1933 = vperm.xlu0 %1932, %v713
        %v1934 = vpop.permute.xlu0 %1933
        %1936 = vset.pattern.permute.xlu0 7
        %1937 = vperm.xlu0 %1936, %v714
        %v1938 = vpop.permute.xlu0 %1937
        %1940 = vset.pattern.permute.xlu0 7
        %1941 = vperm.xlu0 %1940, %v715
        %v1942 = vpop.permute.xlu0 %1941
        %1944 = vset.pattern.permute.xlu0 7
        %1945 = vperm.xlu0 %1944, %v716
        %v1946 = vpop.permute.xlu0 %1945
        %1948 = vset.pattern.permute.xlu0 7
        %1949 = vperm.xlu0 %1948, %v717
        %v1950 = vpop.permute.xlu0 %1949
        %1952 = vset.pattern.permute.xlu0 7
        %1953 = vperm.xlu0 %1952, %v718
        %v1954 = vpop.permute.xlu0 %1953
        %1956 = vset.pattern.permute.xlu0 7
        %1957 = vperm.xlu0 %1956, %v719
        %v1958 = vpop.permute.xlu0 %1957
        %1960 = vset.pattern.permute.xlu0 7
        %1961 = vperm.xlu0 %1960, %v720
        %v1962 = vpop.permute.xlu0 %1961
        %1964 = vset.pattern.permute.xlu0 7
        %1965 = vperm.xlu0 %1964, %v721
        %v1966 = vpop.permute.xlu0 %1965
        %1968 = vset.pattern.permute.xlu0 7
        %1969 = vperm.xlu0 %1968, %v722
        %v1970 = vpop.permute.xlu0 %1969
        %1972 = vset.pattern.permute.xlu0 7
        %1973 = vperm.xlu0 %1972, %v723
        %v1974 = vpop.permute.xlu0 %1973
        %1976 = vset.pattern.permute.xlu0 7
        %1977 = vperm.xlu0 %1976, %v724
        %v1978 = vpop.permute.xlu0 %1977
        %1980 = vset.pattern.permute.xlu0 7
        %1981 = vperm.xlu0 %1980, %v725
        %v1982 = vpop.permute.xlu0 %1981
        %1984 = vset.pattern.permute.xlu0 7
        %1985 = vperm.xlu0 %1984, %v726
        %v1986 = vpop.permute.xlu0 %1985
        %1988 = vset.pattern.permute.xlu0 7
        %1989 = vperm.xlu0 %1988, %v727
        %v1990 = vpop.permute.xlu0 %1989
        %v1992 = vmul.f32 %v1930, %v1912
        %v1993 = vmul.f32 %v1934, %v1913
        %v1994 = vmul.f32 %v1938, %v1914
        %v1995 = vmul.f32 %v1942, %v1915
        %v1996 = vmul.f32 %v1946, %v1916
        %v1997 = vmul.f32 %v1950, %v1917
        %v1998 = vmul.f32 %v1954, %v1918
        %v1999 = vmul.f32 %v1958, %v1919
        %v2000 = vmul.f32 %v1962, %v1920
        %v2001 = vmul.f32 %v1966, %v1921
        %v2002 = vmul.f32 %v1970, %v1922
        %v2003 = vmul.f32 %v1974, %v1923
        %v2004 = vmul.f32 %v1978, %v1924
        %v2005 = vmul.f32 %v1982, %v1925
        %v2006 = vmul.f32 %v1986, %v1926
        %v2007 = vmul.f32 %v1990, %v1927
        %v2008 = vadd.f32 %v1893, %v1992
        %v2009 = vadd.f32 %v1894, %v1993
        %v2010 = vadd.f32 %v1895, %v1994
        %v2011 = vadd.f32 %v1896, %v1995
        %v2012 = vadd.f32 %v1897, %v1996
        %v2013 = vadd.f32 %v1898, %v1997
        %v2014 = vadd.f32 %v1899, %v1998
        %v2015 = vadd.f32 %v1900, %v1999
        %v2016 = vadd.f32 %v1901, %v2000
        %v2017 = vadd.f32 %v1902, %v2001
        %v2018 = vadd.f32 %v1903, %v2002
        %v2019 = vadd.f32 %v1904, %v2003
        %v2020 = vadd.f32 %v1905, %v2004
        %v2021 = vadd.f32 %v1906, %v2005
        %v2022 = vadd.f32 %v1907, %v2006
        %v2023 = vadd.f32 %v1908, %v2007
        %2024 = vst [vmem:[%s161] sm:$0xff] %v2008
        %2025 = vst [vmem:[%s161 + $0x8] sm:$0xff] %v2009
        %2026 = vst [vmem:[%s161 + $0x10] sm:$0xff] %v2010
        %2027 = vst [vmem:[%s161 + $0x18] sm:$0xff] %v2011
        %2028 = vst [vmem:[%s161 + $0x20] sm:$0xff] %v2012
        %2029 = vst [vmem:[%s161 + $0x28] sm:$0xff] %v2013
        %2030 = vst [vmem:[%s161 + $0x30] sm:$0xff] %v2014
        %2031 = vst [vmem:[%s161 + $0x38] sm:$0xff] %v2015
        %2032 = vst [vmem:[%s161 + $0x40] sm:$0xff] %v2016
        %2033 = vst [vmem:[%s161 + $0x48] sm:$0xff] %v2017
        %2034 = vst [vmem:[%s161 + $0x50] sm:$0xff] %v2018
        %2035 = vst [vmem:[%s161 + $0x58] sm:$0xff] %v2019
        %2036 = vst [vmem:[%s161 + $0x60] sm:$0xff] %v2020
        %2037 = vst [vmem:[%s161 + $0x68] sm:$0xff] %v2021
        %2038 = vst [vmem:[%s161 + $0x70] sm:$0xff] %v2022
        %2039 = vst [vmem:[%s161 + $0x78] sm:$0xff] %v2023
        %s2040 = sand.u32 %s84, 1
        %s2041 = scalar_lea.sflag [#allocation7], %s2040
        %s2042 = sand.u32 %s84, 1
        %s2043 = smul.addr %s2042, 128
        %s2044 = scalar_lea.vmem [#allocation6], %s2043
        // Predicated region
        $region325: #{tpu_custom_call.1} parent=27 // pred_check
          %p2045 = pneg %p94
        $region326: #{tpu_custom_call.1} parent=27 // pred_check_branch
          %2047 = sbr.rel (%p2045) target = $region328
        $region327: #{tpu_custom_call.1} parent=27 // pred_region
          %s2048 = smul.u32 16, %s24
          %s2050 = ssub.s32 2048, 2048
          %2051 = vsyncadd %s2041, %s2050
          %s2052 = smul.addr %s2048, 128
          %s2053 = scalar_lea.hbm %s4, %s2052
          %s2054 = sshll.u32 %s2044, 4
          %s2055 = int_to_ptr.vmem [resolvable:$true] %s2054
          %2060 = dma.vmem_to_hbm [thread:$0]  %s2055, 2048, %s2053, %s2041, 128, 128, 8
        $region328: #{tpu_custom_call.1} parent=27 // pred_fallthru
          _
      $region28: #{tpu_custom_call.1} parent=5 // pred_fallthru
        _
      %p2061 = scmp.le.s32.totalorder 2, %s19
      // Predicated region
      $region329: #{tpu_custom_call.1} parent=5 // pred_check
        %p2062 = pneg %p2061
      $region330: #{tpu_custom_call.1} parent=5 // pred_check_branch
        %2064 = sbr.rel (%p2062) target = $region332
      $region331: #{tpu_custom_call.1} parent=5 // pred_region
        %s2065 = ssub.s32 %s19, 2
        // Predicated region
        $region333: #{tpu_custom_call.1} parent=331 // pred_check
          %p2066 = pneg %p100
        $region334: #{tpu_custom_call.1} parent=331 // pred_check_branch
          %2068 = sbr.rel (%p2066) target = $region336
        $region335: #{tpu_custom_call.1} parent=331 // pred_region
          %s2069 = sand.u32 %s85, 1
          %s2070 = scalar_lea.sflag [#allocation7], %s2069
          %s2071 = sand.u32 %s85, 1
          %s2072 = smul.addr %s2071, 128
          %s2073 = scalar_lea.vmem [#allocation6], %s2072
          %2074 = dma.done %s2070, 2048
        $region336: #{tpu_custom_call.1} parent=331 // pred_fallthru
          _
      $region332: #{tpu_custom_call.1} parent=5 // pred_fallthru
        _
    $region6: #{tpu_custom_call.1} parent=1 // loop_footer
      %s23 = sadd.s32 1, %s19
    $region7: #{tpu_custom_call.1} parent=1 // loop_footer_branch
      %18 = sbr.rel target = $region3
    $region8: #{tpu_custom_call.1} parent=1 // loop_exit
      _
    %2075 = vsyncpa [#allocation7], 1
    %s2076 = scalar_lea.sflag [#allocation7], 1
    %2077 = vsyncpa %s2076, 1
  %2078 = vsyncmov [#allocation3]
  %s2079 = vpop.sfrf %2078
  %p2080 = scmp.eq.s32.totalorder %s2079, 0
  %p2081 = pneg %p2080
  %2083 = shalt.err (%p2081)
  %s2084 = scalar_lea.sflag [#allocation3], 1
  %2085 = vsyncmov %s2084
  %s2086 = vpop.sfrf %2085
  %p2087 = scmp.eq.s32.totalorder %s2086, 0
  %p2088 = pneg %p2087
  %2090 = shalt.err (%p2088)
  %s2091 = scalar_lea.sflag [#allocation3], 2
  %2092 = vsyncmov %s2091
  %s2093 = vpop.sfrf %2092
  %p2094 = scmp.eq.s32.totalorder %s2093, 0
  %p2095 = pneg %p2094
  %2097 = shalt.err (%p2095)
  %s2098 = scalar_lea.sflag [#allocation3], 3
  %2099 = vsyncmov %s2098
  %s2100 = vpop.sfrf %2099
  %p2101 = scmp.eq.s32.totalorder %s2100, 0
  %p2102 = pneg %p2101
  %2104 = shalt.err (%p2102)
  %s2105 = scalar_lea.sflag [#allocation3], 4
  %2106 = vsyncmov %s2105
  %s2107 = vpop.sfrf %2106
  %p2108 = scmp.eq.s32.totalorder %s2107, 0
  %p2109 = pneg %p2108
  %2111 = shalt.err (%p2109)
  %s2112 = scalar_lea.sflag [#allocation3], 5
  %2113 = vsyncmov %s2112
  %s2114 = vpop.sfrf %2113
  %p2115 = scmp.eq.s32.totalorder %s2114, 0
  %p2116 = pneg %p2115
  %2118 = shalt.err (%p2116)
  %s2119 = scalar_lea.sflag [#allocation3], 6
  %2120 = vsyncmov %s2119
  %s2121 = vpop.sfrf %2120
  %p2122 = scmp.eq.s32.totalorder %s2121, 0
  %p2123 = pneg %p2122
  %2125 = shalt.err (%p2123)
  %s2126 = scalar_lea.sflag [#allocation3], 7
  %2127 = vsyncmov %s2126
  %s2128 = vpop.sfrf %2127
  %p2129 = scmp.eq.s32.totalorder %s2128, 0
  %p2130 = pneg %p2129
  %2132 = shalt.err (%p2130)

</llo_original>
